<compile_context>
chip_gen: v7x
topology: tpu7x:2x2x1
jax: 0.10.0
libtpu: 0.0.40
codegen_flags: <defaults>
</compile_context>

<pallas_src>
import functools
import math

import jax
import jax.numpy as jnp
from jax import lax
from jax.experimental import pallas as pl
from jax.experimental.pallas import tpu as pltpu

_EPS = 1e-5
_INV_SQRT2 = 0.7071067811865476

# tap order k = (dy+1)*3 + (dx+1)  (matches the flattened 3x3 weight layout)
_TAPS = tuple((dy, dx) for dy in (-1, 0, 1) for dx in (-1, 0, 1))


def _gelu_exact(x):
    # PyTorch nn.GELU() default (approximate='none'): 0.5*x*(1+erf(x/sqrt(2)))
    return 0.5 * x * (1.0 + lax.erf(x * _INV_SQRT2))


# -----------------------------------------------------------------------------
# Pallas kernel
# -----------------------------------------------------------------------------
def _make_kernel(rows_tile, w_up, h_up, cp_in, compute_dtype):
    T = (rows_tile + 4) * w_up          # slab width: rows_tile rows + 2-row halo each side
    interior = rows_tile * w_up         # output width per tile

    def kernel(x_ref, col_ref, lrow_ref, w1_ref, w2_ref, wu_ref,
               b1_ref, b2u_ref, o_ref, patch_ref):
        t = pl.program_id(1)
        x = x_ref[0, 0]                                     # (cp_in, T)

        col = col_ref[...]                                  # (1, T) int32: output column
        not_left_T = col >= 1
        not_right_T = col < (w_up - 1)
        col_i = col[:, :interior]
        not_left_I = col_i >= 1
        not_right_I = col_i < (w_up - 1)

        def im2col(a, row_shift, width, m_left, m_right):
            # Tap (dy, dx) of `a`, shifted down by `row_shift` rows so the
            # result is a lane-aligned prefix of length `width`.  Horizontal
            # wrap of the flattened lane axis is killed by the column masks;
            # vertical taps need no mask thanks to the 2-row halo.
            for k, (dy, dx) in enumerate(_TAPS):
                off = (dy + row_shift) * w_up + dx
                r = a if off == 0 else pltpu.roll(a, shift=(-off) % T, axis=1)
                if width != T:
                    r = r[:, :width]
                if dx == -1:
                    r = jnp.where(m_left, r, 0.0)
                elif dx == 1:
                    r = jnp.where(m_right, r, 0.0)
                patch_ref[pl.ds(k * cp_in, cp_in), pl.ds(0, width)] = r

        # ---- main branch: conv1 -> bn1 (scale folded) -> GELU ---------------
        im2col(x, 0, T, not_left_T, not_right_T)
        h1 = jnp.dot(w1_ref[...], patch_ref[...],
                     preferred_element_type=jnp.float32) + b1_ref[...]
        h1 = _gelu_exact(h1)
        # conv2 zero-pads at the FRAME boundary: zero the h1 rows that fall
        # outside the frame (only bites on the first / last row tile).
        frame_row = t * rows_tile + lrow_ref[...] - 2
        row_valid = jnp.logical_and(frame_row >= 0, frame_row < h_up)
        h1 = jnp.where(row_valid, h1, 0.0).astype(compute_dtype)

        # ---- conv2 -> bn2 (scale folded): interior rows only ----------------
        im2col(h1, 2, interior, not_left_I, not_right_I)
        h2 = jnp.dot(w2_ref[...], patch_ref[:, pl.ds(0, interior)],
                     preferred_element_type=jnp.float32)

        # ---- identity branch: 1x1 proj -> bn_up ; residual ; GELU -----------
        xi = pltpu.roll(x, shift=(-2 * w_up) % T, axis=1)[:, :interior]
        ident = jnp.dot(wu_ref[...], xi, preferred_element_type=jnp.float32)

        o_ref[0, 0] = _gelu_exact(h2 + ident + b2u_ref[...]).astype(o_ref.dtype)

    return kernel


# -----------------------------------------------------------------------------
# Glue: BN folding, weight packing, separable bilinear upsample, tiling choice
# -----------------------------------------------------------------------------
def _round_up(n, m):
    return ((n + m - 1) // m) * m


def _fold_bn(params, name):
    scale = params[f'{name}_gamma'] / jnp.sqrt(params[f'{name}_var'] + _EPS)
    bias = params[f'{name}_beta'] - params[f'{name}_mean'] * scale
    return scale, bias


def _conv3x3_matrix(w_oihw, o_pad, i_pad):
    """OIHW 3x3 weights -> (o_pad, 9*i_pad); column block k = tap (ky, kx)."""
    o, i = w_oihw.shape[:2]
    wp = jnp.pad(w_oihw, ((0, o_pad - o), (0, i_pad - i), (0, 0), (0, 0)))
    return jnp.transpose(wp, (0, 2, 3, 1)).reshape(o_pad, 9 * i_pad)


def _upsample_axis(x, axis, s):
    """F.interpolate(scale_factor=s, mode='bilinear', align_corners=False)
    along a single axis (separable lerp)."""
    n = x.shape[axis]
    o = jnp.arange(n * s, dtype=jnp.float32)
    src = jnp.clip((o + 0.5) / s - 0.5, 0.0, float(n - 1))
    i0 = jnp.floor(src).astype(jnp.int32)
    i1 = jnp.minimum(i0 + 1, n - 1)
    f = src - i0.astype(jnp.float32)
    shape = [1] * x.ndim
    shape[axis] = n * s
    f = f.reshape(shape)
    return jnp.take(x, i0, axis=axis) * (1.0 - f) + jnp.take(x, i1, axis=axis) * f


def _vmem_limit_bytes():
    """Scoped-VMEM limit derived from the chip (v7x: 64 MiB phys, v5e/v6e: 128)."""
    try:
        info = pltpu.get_tpu_info()
        cap = int(getattr(info, "vmem_capacity_bytes", 64 * 1024 * 1024))
    except Exception:
        cap = 64 * 1024 * 1024          # conservative fallback (v7x physical)
    return min(int(cap * 0.85), 100 * 1024 * 1024)


def _pick_rows_tile(h_up, w_up, cp_in, cp_out, elt_bytes, budget_bytes):
    """Largest divisor of h_up whose per-step VMEM footprint fits the budget."""
    best = 1
    for rt in range(1, h_up + 1):
        if h_up % rt:
            continue
        T = (rt + 4) * w_up
        interior = rt * w_up
        need = (2 * cp_in * T * elt_bytes          # double-buffered input slabs
                + 2 * cp_out * interior * 4        # double-buffered f32 output
                + 9 * cp_in * T * elt_bytes        # im2col scratch
                + 3 * cp_in * T * 4                # f32 temporaries (h1, rolls)
                + 9 * cp_in * (cp_in + cp_out) * elt_bytes)   # packed weights
        if need <= budget_bytes:
            best = rt
    # TODO(synk): add column tiling if even a single row per step overflows.
    return best


# -----------------------------------------------------------------------------
# Forward wrapper
# -----------------------------------------------------------------------------
def conv_up_block_forward(x_nchw, params, scale_factor=2,
                          compute_dtype=jnp.bfloat16, rows_tile=None,
                          out_dtype=jnp.float32):
    b, c_in, h, w = x_nchw.shape
    c_out = params['w2'].shape[0]
    h_up, w_up = h * scale_factor, w * scale_factor
    pad_mult = 16 if compute_dtype == jnp.bfloat16 else 8
    cp_in = _round_up(c_in, pad_mult)
    cp_out = _round_up(c_out, pad_mult)
    elt_bytes = jnp.dtype(compute_dtype).itemsize

    vmem_limit = _vmem_limit_bytes()
    if rows_tile is None:
        rows_tile = _pick_rows_tile(
            h_up, w_up, cp_in, cp_out, elt_bytes,
            min(int(vmem_limit * 0.7), 48 * 1024 * 1024))
    assert h_up % rows_tile == 0, (h_up, rows_tile)
    n_tiles = h_up // rows_tile
    T = (rows_tile + 4) * w_up
    interior = rows_tile * w_up

    # --- XLA glue: bilinear 2x upsample (align_corners=False), channel pad,
    #     cast to compute dtype, per-row-tile slabs with a 2-row zero halo.
    x = x_nchw.astype(jnp.float32)
    xu = _upsample_axis(_upsample_axis(x, 2, scale_factor), 3, scale_factor)
    xu = jnp.pad(xu, ((0, 0), (0, cp_in - c_in), (0, 0), (0, 0)))
    xu = xu.astype(compute_dtype)
    xpad = jnp.pad(xu, ((0, 0), (0, 0), (2, 2), (0, 0)))      # zero row halo
    row_ids = (jnp.arange(n_tiles, dtype=jnp.int32)[:, None] * rows_tile
               + jnp.arange(rows_tile + 4, dtype=jnp.int32)[None, :])
    x_tiles = xpad[:, :, row_ids, :]                           # (b, cp_in, nt, rt+4, w_up)
    x_tiles = jnp.transpose(x_tiles, (0, 2, 1, 3, 4)).reshape(b, n_tiles, cp_in, T)

    col_idx = jnp.tile(jnp.arange(w_up, dtype=jnp.int32),
                       rows_tile + 4).reshape(1, T)
    lrow_idx = jnp.repeat(jnp.arange(rows_tile + 4, dtype=jnp.int32),
                          w_up).reshape(1, T)

    # --- BN (eval mode) folded: scales into weights, biases kept.
    s1, b1 = _fold_bn(params, 'bn1')
    s2, b2 = _fold_bn(params, 'bn2')
    su, bu = _fold_bn(params, 'bnup')

    w1m = _conv3x3_matrix(params['w1'] * s1[:, None, None, None],
                          cp_in, cp_in).astype(compute_dtype)
    w2m = _conv3x3_matrix(params['w2'] * s2[:, None, None, None],
                          cp_out, cp_in).astype(compute_dtype)
    wum = jnp.pad(params['wup'][:, :, 0, 0] * su[:, None],
                  ((0, cp_out - c_out), (0, cp_in - c_in))).astype(compute_dtype)

    b1c = jnp.pad(b1, (0, cp_in - c_in)).reshape(cp_in, 1).astype(jnp.float32)
    b2uc = jnp.pad(b2 + bu, (0, cp_out - c_out)).reshape(cp_out, 1).astype(jnp.float32)

    kernel = _make_kernel(rows_tile, w_up, h_up, cp_in, compute_dtype)

    out_tiles = pl.pallas_call(
        kernel,
        out_shape=jax.ShapeDtypeStruct((b, n_tiles, cp_out, interior), out_dtype),
        grid=(b, n_tiles),
        in_specs=[
            pl.BlockSpec((1, 1, cp_in, T), lambda i, t: (i, t, 0, 0)),   # haloed x slab
            pl.BlockSpec((1, T), lambda i, t: (0, 0)),                   # column index
            pl.BlockSpec((1, T), lambda i, t: (0, 0)),                   # local row index
            pl.BlockSpec((cp_in, 9 * cp_in), lambda i, t: (0, 0)),       # conv1 w (bn1 folded)
            pl.BlockSpec((cp_out, 9 * cp_in), lambda i, t: (0, 0)),      # conv2 w (bn2 folded)
            pl.BlockSpec((cp_out, cp_in), lambda i, t: (0, 0)),          # 1x1 proj w (bn_up folded)
            pl.BlockSpec((cp_in, 1), lambda i, t: (0, 0)),               # bn1 bias
            pl.BlockSpec((cp_out, 1), lambda i, t: (0, 0)),              # bn2 + bn_up bias
        ],
        out_specs=pl.BlockSpec((1, 1, cp_out, interior), lambda i, t: (i, t, 0, 0)),
        scratch_shapes=[pltpu.VMEM((9 * cp_in, T), compute_dtype)],
        compiler_params=pltpu.CompilerParams(
            dimension_semantics=("parallel", "parallel"),
            vmem_limit_bytes=vmem_limit),
    )(x_tiles, col_idx, lrow_idx, w1m, w2m, wum, b1c, b2uc)

    # back to NCHW; drop channel padding
    out = out_tiles.reshape(b, n_tiles, cp_out, rows_tile, w_up)
    out = jnp.transpose(out, (0, 2, 1, 3, 4)).reshape(b, cp_out, h_up, w_up)
    return out[:, :c_out]


# -----------------------------------------------------------------------------
# Deterministic parameter init (module __init__ shapes) and pure-JAX reference
# -----------------------------------------------------------------------------
def init_params(key, c_in, c_out):
    keys = jax.random.split(key, 15)

    def conv_w(k, shape):
        fan_in = shape[1] * shape[2] * shape[3]
        bound = 1.0 / math.sqrt(fan_in)
        return jax.random.uniform(k, shape, jnp.float32, -bound, bound)

    p = {
        'w1': conv_w(keys[0], (c_in, c_in, 3, 3)),     # conv1 (OIHW)
        'w2': conv_w(keys[1], (c_out, c_in, 3, 3)),    # conv2 (OIHW)
        'wup': conv_w(keys[2], (c_out, c_in, 1, 1)),   # 1x1 "upsample" proj
    }
    for i, (name, c) in enumerate((('bn1', c_in), ('bn2', c_out), ('bnup', c_out))):
        k0, k1, k2, k3 = keys[3 + 4 * i: 7 + 4 * i]
        p[f'{name}_gamma'] = 1.0 + 0.1 * jax.random.normal(k0, (c,), jnp.float32)
        p[f'{name}_beta'] = 0.1 * jax.random.normal(k1, (c,), jnp.float32)
        p[f'{name}_mean'] = 0.1 * jax.random.normal(k2, (c,), jnp.float32)
        p[f'{name}_var'] = 1.0 + 0.1 * jax.random.uniform(k3, (c,), jnp.float32)
    return p


def reference_forward(x_nchw, params, scale_factor=2):
    """Pure-JAX (XLA) reference mirroring the PyTorch module (eval-mode BN)."""
    x = x_nchw.astype(jnp.float32)
    x = _upsample_axis(_upsample_axis(x, 2, scale_factor), 3, scale_factor)

    def conv(inp, w, padding):
        return lax.conv_general_dilated(
            inp, w, window_strides=(1, 1), padding=padding,
            dimension_numbers=('NCHW', 'OIHW', 'NCHW'),
            precision=lax.Precision.HIGHEST)

    def bn(inp, name):
        s, b_ = _fold_bn(params, name)
        return inp * s[None, :, None, None] + b_[None, :, None, None]

    identity = bn(conv(x, params['wup'], 'VALID'), 'bnup')
    out = _gelu_exact(bn(conv(x, params['w1'], ((1, 1), (1, 1))), 'bn1'))
    out = bn(conv(out, params['w2'], ((1, 1), (1, 1))), 'bn2')
    out = _gelu_exact(out + identity)
    return out


if __name__ == "__main__":
    key = jax.random.PRNGKey(0)
    k_x, k_p = jax.random.split(key)

    B, C_IN, C_OUT, H, W = 2, 4, 8, 16, 16
    x = jax.random.normal(k_x, (B, C_IN, H, W), jnp.float32)
    params = init_params(k_p, C_IN, C_OUT)

    ref = jax.block_until_ready(reference_forward(x, params))

    # f32 compute path (exact module semantics), forced multi-row-tile grid so
    # the halo / frame-boundary logic is exercised across tiles.
    fwd_f32 = jax.jit(functools.partial(
        conv_up_block_forward, compute_dtype=jnp.float32, rows_tile=8))
    out32 = jax.block_until_ready(fwd_f32(x, params))
    assert out32.shape == (B, C_OUT, 2 * H, 2 * W), out32.shape
    err32 = float(jnp.max(jnp.abs(out32 - ref)))
    assert err32 < 3e-3, f"f32 path mismatch vs reference: {err32}"

    # bf16 compute path (MXU fast path), auto VMEM-budgeted tile selection.
    fwd_bf16 = jax.jit(functools.partial(
        conv_up_block_forward, compute_dtype=jnp.bfloat16))
    out16 = jax.block_until_ready(fwd_bf16(x, params))
    assert out16.shape == (B, C_OUT, 2 * H, 2 * W), out16.shape
    err16 = float(jnp.max(jnp.abs(out16 - ref)))
    assert err16 < 5e-2, f"bf16 path mismatch vs reference: {err16}"

    print("KERNEL_OK")
</pallas_src>

<mosaic_0001>
module attributes {stable_mosaic.version = 11 : i64} {
  func.func @kernel(%arg0: i32, %arg1: i32, %arg2: memref<1x1x8x384xf32, #tpu.memory_space<vmem>>, %arg3: memref<1x384xi32, #tpu.memory_space<vmem>>, %arg4: memref<1x384xi32, #tpu.memory_space<vmem>>, %arg5: memref<8x72xf32, #tpu.memory_space<vmem>>, %arg6: memref<8x72xf32, #tpu.memory_space<vmem>>, %arg7: memref<8x8xf32, #tpu.memory_space<vmem>>, %arg8: memref<8x1xf32, #tpu.memory_space<vmem>>, %arg9: memref<8x1xf32, #tpu.memory_space<vmem>>, %arg10: memref<1x1x8x256xf32, #tpu.memory_space<vmem>>, %arg11: memref<72x384xf32, #tpu.memory_space<vmem>>) attributes {dimension_semantics = [#tpu.dimension_semantics<parallel>, #tpu.dimension_semantics<parallel>], iteration_bounds = array<i64: 2, 4>, scalar_prefetch = 0 : i64, scratch_operands = 1 : i64, tpu.core_type = #tpu.core_type<tc>, window_params = [{transform_indices = @transform_0, window_bounds = array<i64: 1, 1, 8, 384>}, {pipeline_mode = #tpu.pipeline_mode<synchronous>, transform_indices = @transform_1, window_bounds = array<i64: 1, 384>}, {pipeline_mode = #tpu.pipeline_mode<synchronous>, transform_indices = @transform_2, window_bounds = array<i64: 1, 384>}, {pipeline_mode = #tpu.pipeline_mode<synchronous>, transform_indices = @transform_3, window_bounds = array<i64: 8, 72>}, {pipeline_mode = #tpu.pipeline_mode<synchronous>, transform_indices = @transform_4, window_bounds = array<i64: 8, 72>}, {pipeline_mode = #tpu.pipeline_mode<synchronous>, transform_indices = @transform_5, window_bounds = array<i64: 8, 8>}, {pipeline_mode = #tpu.pipeline_mode<synchronous>, transform_indices = @transform_6, window_bounds = array<i64: 8, 1>}, {pipeline_mode = #tpu.pipeline_mode<synchronous>, transform_indices = @transform_7, window_bounds = array<i64: 8, 1>}, {transform_indices = @transform_8, window_bounds = array<i64: 1, 1, 8, 256>}]} {
    %c0 = arith.constant 0 : index
    %c0_0 = arith.constant 0 : index
    %c0_1 = arith.constant 0 : index
    %c0_2 = arith.constant 0 : index
    %0 = vector.load %arg2[%c0, %c0_0, %c0_1, %c0_2] : memref<1x1x8x384xf32, #tpu.memory_space<vmem>>, vector<1x1x8x384xf32>
    %1 = vector.shape_cast %0 : vector<1x1x8x384xf32> to vector<8x384xf32>
    %c0_3 = arith.constant 0 : index
    %c0_4 = arith.constant 0 : index
    %2 = vector.load %arg3[%c0_3, %c0_4] : memref<1x384xi32, #tpu.memory_space<vmem>>, vector<1x384xi32>
    %c1_i32 = arith.constant 1 : i32
    %3 = vector.broadcast %c1_i32 : i32 to vector<1x384xi32>
    %4 = arith.cmpi sge, %2, %3 : vector<1x384xi32>
    %c31_i32 = arith.constant 31 : i32
    %5 = vector.broadcast %c31_i32 : i32 to vector<1x384xi32>
    %6 = arith.cmpi slt, %2, %5 : vector<1x384xi32>
    %7 = vector.extract_strided_slice %2 {offsets = [0, 0], sizes = [1, 256], strides = [1, 1]} : vector<1x384xi32> to vector<1x256xi32>
    %c1_i32_5 = arith.constant 1 : i32
    %8 = vector.broadcast %c1_i32_5 : i32 to vector<1x256xi32>
    %9 = arith.cmpi sge, %7, %8 : vector<1x256xi32>
    %c31_i32_6 = arith.constant 31 : i32
    %10 = vector.broadcast %c31_i32_6 : i32 to vector<1x256xi32>
    %11 = arith.cmpi slt, %7, %10 : vector<1x256xi32>
    %c33_i32 = arith.constant 33 : i32
    %12 = tpu.dynamic_rotate %1 by %c33_i32 dim 1 : vector<8x384xf32>, i32 -> vector<8x384xf32>
    %cst = arith.constant 0.000000e+00 : f32
    %13 = vector.shape_cast %4 : vector<1x384xi1> to vector<1x384xi1>
    %14 = vector.broadcast %13 : vector<1x384xi1> to vector<8x384xi1>
    %15 = vector.broadcast %cst : f32 to vector<8x384xf32>
    %16 = arith.select %14, %12, %15 : vector<8x384xi1>, vector<8x384xf32>
    %c0_7 = arith.constant 0 : index
    %c0_8 = arith.constant 0 : index
    %17 = vector.load %arg11[%c0_7, %c0_8] : memref<72x384xf32, #tpu.memory_space<vmem>>, vector<8x384xf32>
    tpu.vector_store %arg11[%c0_7, %c0_8], %16 {strides = array<i32>} : memref<72x384xf32, #tpu.memory_space<vmem>>, vector<8x384xf32>,
    %c32_i32 = arith.constant 32 : i32
    %18 = tpu.dynamic_rotate %1 by %c32_i32 dim 1 : vector<8x384xf32>, i32 -> vector<8x384xf32>
    %c8 = arith.constant 8 : index
    %c0_9 = arith.constant 0 : index
    %19 = vector.load %arg11[%c8, %c0_9] : memref<72x384xf32, #tpu.memory_space<vmem>>, vector<8x384xf32>
    tpu.vector_store %arg11[%c8, %c0_9], %18 {strides = array<i32>} : memref<72x384xf32, #tpu.memory_space<vmem>>, vector<8x384xf32>,
    %c31_i32_10 = arith.constant 31 : i32
    %20 = tpu.dynamic_rotate %1 by %c31_i32_10 dim 1 : vector<8x384xf32>, i32 -> vector<8x384xf32>
    %cst_11 = arith.constant 0.000000e+00 : f32
    %21 = vector.shape_cast %6 : vector<1x384xi1> to vector<1x384xi1>
    %22 = vector.broadcast %21 : vector<1x384xi1> to vector<8x384xi1>
    %23 = vector.broadcast %cst_11 : f32 to vector<8x384xf32>
    %24 = arith.select %22, %20, %23 : vector<8x384xi1>, vector<8x384xf32>
    %c16 = arith.constant 16 : index
    %c0_12 = arith.constant 0 : index
    %25 = vector.load %arg11[%c16, %c0_12] : memref<72x384xf32, #tpu.memory_space<vmem>>, vector<8x384xf32>
    tpu.vector_store %arg11[%c16, %c0_12], %24 {strides = array<i32>} : memref<72x384xf32, #tpu.memory_space<vmem>>, vector<8x384xf32>,
    %c1_i32_13 = arith.constant 1 : i32
    %26 = tpu.dynamic_rotate %1 by %c1_i32_13 dim 1 : vector<8x384xf32>, i32 -> vector<8x384xf32>
    %cst_14 = arith.constant 0.000000e+00 : f32
    %27 = vector.shape_cast %4 : vector<1x384xi1> to vector<1x384xi1>
    %28 = vector.broadcast %27 : vector<1x384xi1> to vector<8x384xi1>
    %29 = vector.broadcast %cst_14 : f32 to vector<8x384xf32>
    %30 = arith.select %28, %26, %29 : vector<8x384xi1>, vector<8x384xf32>
    %c24 = arith.constant 24 : index
    %c0_15 = arith.constant 0 : index
    %31 = vector.load %arg11[%c24, %c0_15] : memref<72x384xf32, #tpu.memory_space<vmem>>, vector<8x384xf32>
    tpu.vector_store %arg11[%c24, %c0_15], %30 {strides = array<i32>} : memref<72x384xf32, #tpu.memory_space<vmem>>, vector<8x384xf32>,
    %c32 = arith.constant 32 : index
    %c0_16 = arith.constant 0 : index
    %32 = vector.load %arg11[%c32, %c0_16] : memref<72x384xf32, #tpu.memory_space<vmem>>, vector<8x384xf32>
    tpu.vector_store %arg11[%c32, %c0_16], %1 {strides = array<i32>} : memref<72x384xf32, #tpu.memory_space<vmem>>, vector<8x384xf32>,
    %c383_i32 = arith.constant 383 : i32
    %33 = tpu.dynamic_rotate %1 by %c383_i32 dim 1 : vector<8x384xf32>, i32 -> vector<8x384xf32>
    %cst_17 = arith.constant 0.000000e+00 : f32
    %34 = vector.shape_cast %6 : vector<1x384xi1> to vector<1x384xi1>
    %35 = vector.broadcast %34 : vector<1x384xi1> to vector<8x384xi1>
    %36 = vector.broadcast %cst_17 : f32 to vector<8x384xf32>
    %37 = arith.select %35, %33, %36 : vector<8x384xi1>, vector<8x384xf32>
    %c40 = arith.constant 40 : index
    %c0_18 = arith.constant 0 : index
    %38 = vector.load %arg11[%c40, %c0_18] : memref<72x384xf32, #tpu.memory_space<vmem>>, vector<8x384xf32>
    tpu.vector_store %arg11[%c40, %c0_18], %37 {strides = array<i32>} : memref<72x384xf32, #tpu.memory_space<vmem>>, vector<8x384xf32>,
    %c353_i32 = arith.constant 353 : i32
    %39 = tpu.dynamic_rotate %1 by %c353_i32 dim 1 : vector<8x384xf32>, i32 -> vector<8x384xf32>
    %cst_19 = arith.constant 0.000000e+00 : f32
    %40 = vector.shape_cast %4 : vector<1x384xi1> to vector<1x384xi1>
    %41 = vector.broadcast %40 : vector<1x384xi1> to vector<8x384xi1>
    %42 = vector.broadcast %cst_19 : f32 to vector<8x384xf32>
    %43 = arith.select %41, %39, %42 : vector<8x384xi1>, vector<8x384xf32>
    %c48 = arith.constant 48 : index
    %c0_20 = arith.constant 0 : index
    %44 = vector.load %arg11[%c48, %c0_20] : memref<72x384xf32, #tpu.memory_space<vmem>>, vector<8x384xf32>
    tpu.vector_store %arg11[%c48, %c0_20], %43 {strides = array<i32>} : memref<72x384xf32, #tpu.memory_space<vmem>>, vector<8x384xf32>,
    %c352_i32 = arith.constant 352 : i32
    %45 = tpu.dynamic_rotate %1 by %c352_i32 dim 1 : vector<8x384xf32>, i32 -> vector<8x384xf32>
    %c56 = arith.constant 56 : index
    %c0_21 = arith.constant 0 : index
    %46 = vector.load %arg11[%c56, %c0_21] : memref<72x384xf32, #tpu.memory_space<vmem>>, vector<8x384xf32>
    tpu.vector_store %arg11[%c56, %c0_21], %45 {strides = array<i32>} : memref<72x384xf32, #tpu.memory_space<vmem>>, vector<8x384xf32>,
    %c351_i32 = arith.constant 351 : i32
    %47 = tpu.dynamic_rotate %1 by %c351_i32 dim 1 : vector<8x384xf32>, i32 -> vector<8x384xf32>
    %cst_22 = arith.constant 0.000000e+00 : f32
    %48 = vector.shape_cast %6 : vector<1x384xi1> to vector<1x384xi1>
    %49 = vector.broadcast %48 : vector<1x384xi1> to vector<8x384xi1>
    %50 = vector.broadcast %cst_22 : f32 to vector<8x384xf32>
    %51 = arith.select %49, %47, %50 : vector<8x384xi1>, vector<8x384xf32>
    %c64 = arith.constant 64 : index
    %c0_23 = arith.constant 0 : index
    %52 = vector.load %arg11[%c64, %c0_23] : memref<72x384xf32, #tpu.memory_space<vmem>>, vector<8x384xf32>
    tpu.vector_store %arg11[%c64, %c0_23], %51 {strides = array<i32>} : memref<72x384xf32, #tpu.memory_space<vmem>>, vector<8x384xf32>,
    %c0_24 = arith.constant 0 : index
    %c0_25 = arith.constant 0 : index
    %53 = vector.load %arg5[%c0_24, %c0_25] : memref<8x72xf32, #tpu.memory_space<vmem>>, vector<8x72xf32>
    %c0_26 = arith.constant 0 : index
    %c0_27 = arith.constant 0 : index
    %54 = vector.load %arg11[%c0_26, %c0_27] : memref<72x384xf32, #tpu.memory_space<vmem>>, vector<72x384xf32>
    %cst_28 = arith.constant dense<0.000000e+00> : vector<8x384xf32>
    %55 = tpu.matmul %53, %54, %cst_28 {dimension_numbers = #tpu.dot_dimension_numbers<[1], [0], [0], [1], [0, 0, 1, 1], [], []>} : vector<8x72xf32>, vector<72x384xf32>, vector<8x384xf32> -> vector<8x384xf32>
    %c0_29 = arith.constant 0 : index
    %c0_30 = arith.constant 0 : index
    %56 = vector.load %arg8[%c0_29, %c0_30] : memref<8x1xf32, #tpu.memory_space<vmem>>, vector<8x1xf32>
    %57 = vector.broadcast %56 : vector<8x1xf32> to vector<8x384xf32>
    %58 = arith.addf %55, %57 : vector<8x384xf32>
    %cst_31 = arith.constant 5.000000e-01 : f32
    %59 = vector.broadcast %cst_31 : f32 to vector<8x384xf32>
    %60 = arith.mulf %59, %58 : vector<8x384xf32>
    %cst_32 = arith.constant 0.707106769 : f32
    %61 = vector.broadcast %cst_32 : f32 to vector<8x384xf32>
    %62 = arith.mulf %58, %61 : vector<8x384xf32>
    %63 = math.erf %62 : vector<8x384xf32>
    %cst_33 = arith.constant 1.000000e+00 : f32
    %64 = vector.broadcast %cst_33 : f32 to vector<8x384xf32>
    %65 = arith.addf %64, %63 : vector<8x384xf32>
    %66 = arith.mulf %60, %65 : vector<8x384xf32>
    %c8_i32 = arith.constant 8 : i32
    %67 = arith.muli %arg1, %c8_i32 : i32
    %c0_34 = arith.constant 0 : index
    %c0_35 = arith.constant 0 : index
    %68 = vector.load %arg4[%c0_34, %c0_35] : memref<1x384xi32, #tpu.memory_space<vmem>>, vector<1x384xi32>
    %69 = vector.broadcast %67 : i32 to vector<1x384xi32>
    %70 = arith.addi %69, %68 : vector<1x384xi32>
    %c2_i32 = arith.constant 2 : i32
    %71 = vector.broadcast %c2_i32 : i32 to vector<1x384xi32>
    %72 = arith.subi %70, %71 : vector<1x384xi32>
    %c0_i32 = arith.constant 0 : i32
    %73 = vector.broadcast %c0_i32 : i32 to vector<1x384xi32>
    %74 = arith.cmpi sge, %72, %73 : vector<1x384xi32>
    %c32_i32_36 = arith.constant 32 : i32
    %75 = vector.broadcast %c32_i32_36 : i32 to vector<1x384xi32>
    %76 = arith.cmpi slt, %72, %75 : vector<1x384xi32>
    %77 = arith.andi %74, %76 : vector<1x384xi1>
    %cst_37 = arith.constant 0.000000e+00 : f32
    %78 = vector.shape_cast %77 : vector<1x384xi1> to vector<1x384xi1>
    %79 = vector.broadcast %78 : vector<1x384xi1> to vector<8x384xi1>
    %80 = vector.broadcast %cst_37 : f32 to vector<8x384xf32>
    %81 = arith.select %79, %66, %80 : vector<8x384xi1>, vector<8x384xf32>
    %c353_i32_38 = arith.constant 353 : i32
    %82 = tpu.dynamic_rotate %81 by %c353_i32_38 dim 1 : vector<8x384xf32>, i32 -> vector<8x384xf32>
    %83 = vector.extract_strided_slice %82 {offsets = [0, 0], sizes = [8, 256], strides = [1, 1]} : vector<8x384xf32> to vector<8x256xf32>
    %cst_39 = arith.constant 0.000000e+00 : f32
    %84 = vector.shape_cast %9 : vector<1x256xi1> to vector<1x256xi1>
    %85 = vector.broadcast %84 : vector<1x256xi1> to vector<8x256xi1>
    %86 = vector.broadcast %cst_39 : f32 to vector<8x256xf32>
    %87 = arith.select %85, %83, %86 : vector<8x256xi1>, vector<8x256xf32>
    %c0_40 = arith.constant 0 : index
    %c0_41 = arith.constant 0 : index
    %88 = vector.load %arg11[%c0_40, %c0_41] : memref<72x384xf32, #tpu.memory_space<vmem>>, vector<8x256xf32>
    tpu.vector_store %arg11[%c0_40, %c0_41], %87 {strides = array<i32>} : memref<72x384xf32, #tpu.memory_space<vmem>>, vector<8x256xf32>,
    %c352_i32_42 = arith.constant 352 : i32
    %89 = tpu.dynamic_rotate %81 by %c352_i32_42 dim 1 : vector<8x384xf32>, i32 -> vector<8x384xf32>
    %90 = vector.extract_strided_slice %89 {offsets = [0, 0], sizes = [8, 256], strides = [1, 1]} : vector<8x384xf32> to vector<8x256xf32>
    %c8_43 = arith.constant 8 : index
    %c0_44 = arith.constant 0 : index
    %91 = vector.load %arg11[%c8_43, %c0_44] : memref<72x384xf32, #tpu.memory_space<vmem>>, vector<8x256xf32>
    tpu.vector_store %arg11[%c8_43, %c0_44], %90 {strides = array<i32>} : memref<72x384xf32, #tpu.memory_space<vmem>>, vector<8x256xf32>,
    %c351_i32_45 = arith.constant 351 : i32
    %92 = tpu.dynamic_rotate %81 by %c351_i32_45 dim 1 : vector<8x384xf32>, i32 -> vector<8x384xf32>
    %93 = vector.extract_strided_slice %92 {offsets = [0, 0], sizes = [8, 256], strides = [1, 1]} : vector<8x384xf32> to vector<8x256xf32>
    %cst_46 = arith.constant 0.000000e+00 : f32
    %94 = vector.shape_cast %11 : vector<1x256xi1> to vector<1x256xi1>
    %95 = vector.broadcast %94 : vector<1x256xi1> to vector<8x256xi1>
    %96 = vector.broadcast %cst_46 : f32 to vector<8x256xf32>
    %97 = arith.select %95, %93, %96 : vector<8x256xi1>, vector<8x256xf32>
    %c16_47 = arith.constant 16 : index
    %c0_48 = arith.constant 0 : index
    %98 = vector.load %arg11[%c16_47, %c0_48] : memref<72x384xf32, #tpu.memory_space<vmem>>, vector<8x256xf32>
    tpu.vector_store %arg11[%c16_47, %c0_48], %97 {strides = array<i32>} : memref<72x384xf32, #tpu.memory_space<vmem>>, vector<8x256xf32>,
    %c321_i32 = arith.constant 321 : i32
    %99 = tpu.dynamic_rotate %81 by %c321_i32 dim 1 : vector<8x384xf32>, i32 -> vector<8x384xf32>
    %100 = vector.extract_strided_slice %99 {offsets = [0, 0], sizes = [8, 256], strides = [1, 1]} : vector<8x384xf32> to vector<8x256xf32>
    %cst_49 = arith.constant 0.000000e+00 : f32
    %101 = vector.shape_cast %9 : vector<1x256xi1> to vector<1x256xi1>
    %102 = vector.broadcast %101 : vector<1x256xi1> to vector<8x256xi1>
    %103 = vector.broadcast %cst_49 : f32 to vector<8x256xf32>
    %104 = arith.select %102, %100, %103 : vector<8x256xi1>, vector<8x256xf32>
    %c24_50 = arith.constant 24 : index
    %c0_51 = arith.constant 0 : index
    %105 = vector.load %arg11[%c24_50, %c0_51] : memref<72x384xf32, #tpu.memory_space<vmem>>, vector<8x256xf32>
    tpu.vector_store %arg11[%c24_50, %c0_51], %104 {strides = array<i32>} : memref<72x384xf32, #tpu.memory_space<vmem>>, vector<8x256xf32>,
    %c320_i32 = arith.constant 320 : i32
    %106 = tpu.dynamic_rotate %81 by %c320_i32 dim 1 : vector<8x384xf32>, i32 -> vector<8x384xf32>
    %107 = vector.extract_strided_slice %106 {offsets = [0, 0], sizes = [8, 256], strides = [1, 1]} : vector<8x384xf32> to vector<8x256xf32>
    %c32_52 = arith.constant 32 : index
    %c0_53 = arith.constant 0 : index
    %108 = vector.load %arg11[%c32_52, %c0_53] : memref<72x384xf32, #tpu.memory_space<vmem>>, vector<8x256xf32>
    tpu.vector_store %arg11[%c32_52, %c0_53], %107 {strides = array<i32>} : memref<72x384xf32, #tpu.memory_space<vmem>>, vector<8x256xf32>,
    %c319_i32 = arith.constant 319 : i32
    %109 = tpu.dynamic_rotate %81 by %c319_i32 dim 1 : vector<8x384xf32>, i32 -> vector<8x384xf32>
    %110 = vector.extract_strided_slice %109 {offsets = [0, 0], sizes = [8, 256], strides = [1, 1]} : vector<8x384xf32> to vector<8x256xf32>
    %cst_54 = arith.constant 0.000000e+00 : f32
    %111 = vector.shape_cast %11 : vector<1x256xi1> to vector<1x256xi1>
    %112 = vector.broadcast %111 : vector<1x256xi1> to vector<8x256xi1>
    %113 = vector.broadcast %cst_54 : f32 to vector<8x256xf32>
    %114 = arith.select %112, %110, %113 : vector<8x256xi1>, vector<8x256xf32>
    %c40_55 = arith.constant 40 : index
    %c0_56 = arith.constant 0 : index
    %115 = vector.load %arg11[%c40_55, %c0_56] : memref<72x384xf32, #tpu.memory_space<vmem>>, vector<8x256xf32>
    tpu.vector_store %arg11[%c40_55, %c0_56], %114 {strides = array<i32>} : memref<72x384xf32, #tpu.memory_space<vmem>>, vector<8x256xf32>,
    %c289_i32 = arith.constant 289 : i32
    %116 = tpu.dynamic_rotate %81 by %c289_i32 dim 1 : vector<8x384xf32>, i32 -> vector<8x384xf32>
    %117 = vector.extract_strided_slice %116 {offsets = [0, 0], sizes = [8, 256], strides = [1, 1]} : vector<8x384xf32> to vector<8x256xf32>
    %cst_57 = arith.constant 0.000000e+00 : f32
    %118 = vector.shape_cast %9 : vector<1x256xi1> to vector<1x256xi1>
    %119 = vector.broadcast %118 : vector<1x256xi1> to vector<8x256xi1>
    %120 = vector.broadcast %cst_57 : f32 to vector<8x256xf32>
    %121 = arith.select %119, %117, %120 : vector<8x256xi1>, vector<8x256xf32>
    %c48_58 = arith.constant 48 : index
    %c0_59 = arith.constant 0 : index
    %122 = vector.load %arg11[%c48_58, %c0_59] : memref<72x384xf32, #tpu.memory_space<vmem>>, vector<8x256xf32>
    tpu.vector_store %arg11[%c48_58, %c0_59], %121 {strides = array<i32>} : memref<72x384xf32, #tpu.memory_space<vmem>>, vector<8x256xf32>,
    %c288_i32 = arith.constant 288 : i32
    %123 = tpu.dynamic_rotate %81 by %c288_i32 dim 1 : vector<8x384xf32>, i32 -> vector<8x384xf32>
    %124 = vector.extract_strided_slice %123 {offsets = [0, 0], sizes = [8, 256], strides = [1, 1]} : vector<8x384xf32> to vector<8x256xf32>
    %c56_60 = arith.constant 56 : index
    %c0_61 = arith.constant 0 : index
    %125 = vector.load %arg11[%c56_60, %c0_61] : memref<72x384xf32, #tpu.memory_space<vmem>>, vector<8x256xf32>
    tpu.vector_store %arg11[%c56_60, %c0_61], %124 {strides = array<i32>} : memref<72x384xf32, #tpu.memory_space<vmem>>, vector<8x256xf32>,
    %c287_i32 = arith.constant 287 : i32
    %126 = tpu.dynamic_rotate %81 by %c287_i32 dim 1 : vector<8x384xf32>, i32 -> vector<8x384xf32>
    %127 = vector.extract_strided_slice %126 {offsets = [0, 0], sizes = [8, 256], strides = [1, 1]} : vector<8x384xf32> to vector<8x256xf32>
    %cst_62 = arith.constant 0.000000e+00 : f32
    %128 = vector.shape_cast %11 : vector<1x256xi1> to vector<1x256xi1>
    %129 = vector.broadcast %128 : vector<1x256xi1> to vector<8x256xi1>
    %130 = vector.broadcast %cst_62 : f32 to vector<8x256xf32>
    %131 = arith.select %129, %127, %130 : vector<8x256xi1>, vector<8x256xf32>
    %c64_63 = arith.constant 64 : index
    %c0_64 = arith.constant 0 : index
    %132 = vector.load %arg11[%c64_63, %c0_64] : memref<72x384xf32, #tpu.memory_space<vmem>>, vector<8x256xf32>
    tpu.vector_store %arg11[%c64_63, %c0_64], %131 {strides = array<i32>} : memref<72x384xf32, #tpu.memory_space<vmem>>, vector<8x256xf32>,
    %c0_65 = arith.constant 0 : index
    %c0_66 = arith.constant 0 : index
    %133 = vector.load %arg6[%c0_65, %c0_66] : memref<8x72xf32, #tpu.memory_space<vmem>>, vector<8x72xf32>
    %c0_67 = arith.constant 0 : index
    %c0_68 = arith.constant 0 : index
    %134 = vector.load %arg11[%c0_67, %c0_68] : memref<72x384xf32, #tpu.memory_space<vmem>>, vector<72x256xf32>
    %cst_69 = arith.constant dense<0.000000e+00> : vector<8x256xf32>
    %135 = tpu.matmul %133, %134, %cst_69 {dimension_numbers = #tpu.dot_dimension_numbers<[1], [0], [0], [1], [0, 0, 1, 1], [], []>} : vector<8x72xf32>, vector<72x256xf32>, vector<8x256xf32> -> vector<8x256xf32>
    %c320_i32_70 = arith.constant 320 : i32
    %136 = tpu.dynamic_rotate %1 by %c320_i32_70 dim 1 : vector<8x384xf32>, i32 -> vector<8x384xf32>
    %137 = vector.extract_strided_slice %136 {offsets = [0, 0], sizes = [8, 256], strides = [1, 1]} : vector<8x384xf32> to vector<8x256xf32>
    %c0_71 = arith.constant 0 : index
    %c0_72 = arith.constant 0 : index
    %138 = vector.load %arg7[%c0_71, %c0_72] : memref<8x8xf32, #tpu.memory_space<vmem>>, vector<8x8xf32>
    %cst_73 = arith.constant dense<0.000000e+00> : vector<8x256xf32>
    %139 = tpu.matmul %138, %137, %cst_73 {dimension_numbers = #tpu.dot_dimension_numbers<[1], [0], [0], [1], [0, 0, 1, 1], [], []>} : vector<8x8xf32>, vector<8x256xf32>, vector<8x256xf32> -> vector<8x256xf32>
    %140 = arith.addf %135, %139 : vector<8x256xf32>
    %c0_74 = arith.constant 0 : index
    %c0_75 = arith.constant 0 : index
    %141 = vector.load %arg9[%c0_74, %c0_75] : memref<8x1xf32, #tpu.memory_space<vmem>>, vector<8x1xf32>
    %142 = vector.broadcast %141 : vector<8x1xf32> to vector<8x256xf32>
    %143 = arith.addf %140, %142 : vector<8x256xf32>
    %cst_76 = arith.constant 5.000000e-01 : f32
    %144 = vector.broadcast %cst_76 : f32 to vector<8x256xf32>
    %145 = arith.mulf %144, %143 : vector<8x256xf32>
    %cst_77 = arith.constant 0.707106769 : f32
    %146 = vector.broadcast %cst_77 : f32 to vector<8x256xf32>
    %147 = arith.mulf %143, %146 : vector<8x256xf32>
    %148 = math.erf %147 : vector<8x256xf32>
    %cst_78 = arith.constant 1.000000e+00 : f32
    %149 = vector.broadcast %cst_78 : f32 to vector<8x256xf32>
    %150 = arith.addf %149, %148 : vector<8x256xf32>
    %151 = arith.mulf %145, %150 : vector<8x256xf32>
    %c0_79 = arith.constant 0 : index
    %c0_80 = arith.constant 0 : index
    %c0_81 = arith.constant 0 : index
    %c0_82 = arith.constant 0 : index
    %152 = vector.load %arg10[%c0_79, %c0_80, %c0_81, %c0_82] : memref<1x1x8x256xf32, #tpu.memory_space<vmem>>, vector<1x1x8x256xf32>
    %153 = vector.shape_cast %152 : vector<1x1x8x256xf32> to vector<8x256xf32>
    %154 = vector.shape_cast %151 : vector<8x256xf32> to vector<1x1x8x256xf32>
    tpu.vector_store %arg10[%c0_79, %c0_80, %c0_81, %c0_82], %154 {strides = array<i32>} : memref<1x1x8x256xf32, #tpu.memory_space<vmem>>, vector<1x1x8x256xf32>,
    return
  }
  func.func @transform_0(%arg0: i32, %arg1: i32) -> (i32, i32, i32, i32) {
    %c0_i32 = arith.constant 0 : i32
    %c0_i32_0 = arith.constant 0 : i32
    %c0_i32_1 = arith.constant 0 : i32
    return %arg0, %arg1, %c0_i32, %c0_i32_0 : i32, i32, i32, i32
  }
  func.func @transform_1(%arg0: i32, %arg1: i32) -> (i32, i32) {
    %c0_i32 = arith.constant 0 : i32
    %c0_i32_0 = arith.constant 0 : i32
    %c0_i32_1 = arith.constant 0 : i32
    return %c0_i32, %c0_i32_0 : i32, i32
  }
  func.func @transform_2(%arg0: i32, %arg1: i32) -> (i32, i32) {
    %c0_i32 = arith.constant 0 : i32
    %c0_i32_0 = arith.constant 0 : i32
    %c0_i32_1 = arith.constant 0 : i32
    return %c0_i32, %c0_i32_0 : i32, i32
  }
  func.func @transform_3(%arg0: i32, %arg1: i32) -> (i32, i32) {
    %c0_i32 = arith.constant 0 : i32
    %c0_i32_0 = arith.constant 0 : i32
    %c0_i32_1 = arith.constant 0 : i32
    return %c0_i32, %c0_i32_0 : i32, i32
  }
  func.func @transform_4(%arg0: i32, %arg1: i32) -> (i32, i32) {
    %c0_i32 = arith.constant 0 : i32
    %c0_i32_0 = arith.constant 0 : i32
    %c0_i32_1 = arith.constant 0 : i32
    return %c0_i32, %c0_i32_0 : i32, i32
  }
  func.func @transform_5(%arg0: i32, %arg1: i32) -> (i32, i32) {
    %c0_i32 = arith.constant 0 : i32
    %c0_i32_0 = arith.constant 0 : i32
    %c0_i32_1 = arith.constant 0 : i32
    return %c0_i32, %c0_i32_0 : i32, i32
  }
  func.func @transform_6(%arg0: i32, %arg1: i32) -> (i32, i32) {
    %c0_i32 = arith.constant 0 : i32
    %c0_i32_0 = arith.constant 0 : i32
    %c0_i32_1 = arith.constant 0 : i32
    return %c0_i32, %c0_i32_0 : i32, i32
  }
  func.func @transform_7(%arg0: i32, %arg1: i32) -> (i32, i32) {
    %c0_i32 = arith.constant 0 : i32
    %c0_i32_0 = arith.constant 0 : i32
    %c0_i32_1 = arith.constant 0 : i32
    return %c0_i32, %c0_i32_0 : i32, i32
  }
  func.func @transform_8(%arg0: i32, %arg1: i32) -> (i32, i32, i32, i32) {
    %c0_i32 = arith.constant 0 : i32
    %c0_i32_0 = arith.constant 0 : i32
    %c0_i32_1 = arith.constant 0 : i32
    return %arg0, %arg1, %c0_i32, %c0_i32_0 : i32, i32, i32, i32
  }
}

</mosaic_0001>

<llo_original>
// kernel: conv_up_block_forward.1
$region0: #{conv_up_block_forward.1}
  #allocation0 [shape = 'u32[]', space=smem, size = 0x4, offset = 0x4, fixed_abs, tag = 'smem constant byte address 0x4 - core index']
  #allocation1 [shape = 'u32[144,128]{1,0:T(1,128)}', space=vmem, size = 0x12000, scoped, tag = 'internal scratch']
  #allocation2 [shape = 'f32[72,384]{1,0:T(8,128)}', space=vmem, size = 0x1b000, scoped, tag = 'scratch operand']
  %s0 = inlined_call_operand.vmem [shape: f32[2,4,8,384], index: 0, kind: input, shape index: {}]
  %s1 = inlined_call_operand.vmem [shape: s32[1,384], index: 1, kind: input, shape index: {}]
  %s2 = inlined_call_operand.vmem [shape: s32[1,384], index: 2, kind: input, shape index: {}]
  %s3 = inlined_call_operand.vmem [shape: f32[8,72], index: 3, kind: input, shape index: {}]
  %s4 = inlined_call_operand.vmem [shape: f32[8,72], index: 4, kind: input, shape index: {}]
  %s5 = inlined_call_operand.vmem [shape: f32[8,8], index: 5, kind: input, shape index: {}]
  %s6 = inlined_call_operand.vmem [shape: f32[8,1], index: 6, kind: input, shape index: {}]
  %s7 = inlined_call_operand.vmem [shape: f32[8,1], index: 7, kind: input, shape index: {}]
  %s8 = inlined_call_operand.vmem [shape: f32[2,4,8,256], index: 8, kind: output, shape index: {}]
  %s9 = sld [smem:[#allocation0]]
  $region65: #{conv_up_block_forward.1} parent=0
    _
  %s11 = ssub.s32 1, %s9
  %s12 = scalar_select 0, %s11, %s9
  loop: start=0, step=1, limit=10
  $region2: #{conv_up_block_forward.1} parent=0 // loop_pre_header
    _
  $region3: #{conv_up_block_forward.1} parent=0 // loop_header
    %s14 = sphi 0, %s18
    %p15 = scmp.ge.s32.totalorder %s14, 10
    %s21 = sphi 0, %s33
    %s22 = sphi 0, %s29
    %s23 = sphi 0, %s21
    %s24 = sphi 0, %s22
    %s25 = sphi 0, %s23
    %s26 = sphi 0, %s24
    %s38 = sphi 0, %s40
    %s41 = sphi 0, %s38
    %s42 = sphi 0, %s41
    %s58 = sphi 0, %s42
    %s62 = sphi 0, %s62
    %s64 = sphi 0, %s62
    %s65 = sphi 0, %s64
    %s79 = sphi 0, %s65
    %s83 = sphi 0, %s83
    %s85 = sphi 0, %s83
    %s86 = sphi 0, %s85
    %s100 = sphi 0, %s86
    %s104 = sphi 0, %s104
    %s106 = sphi 0, %s104
    %s107 = sphi 0, %s106
    %s121 = sphi 0, %s107
    %s125 = sphi 0, %s125
    %s127 = sphi 0, %s125
    %s128 = sphi 0, %s127
    %s142 = sphi 0, %s128
    %s146 = sphi 0, %s146
    %s148 = sphi 0, %s146
    %s149 = sphi 0, %s148
    %s163 = sphi 0, %s149
    %s167 = sphi 0, %s167
    %s169 = sphi 0, %s167
    %s170 = sphi 0, %s169
    %s184 = sphi 0, %s170
    %s188 = sphi 0, %s188
    %s190 = sphi 0, %s188
    %s191 = sphi 0, %s190
    %s205 = sphi 0, %s191
    %s213 = sphi 0, %s215
    %s216 = sphi 0, %s213
    %s217 = sphi 0, %s216
    %s233 = sphi 0, %s217
  $region4: #{conv_up_block_forward.1} parent=0 // loop_header_branch
    %17 = sbr.rel (%p15) target = $region8
  $region5: #{conv_up_block_forward.1} parent=0 // loop_body
    %s19 = ssub.s32 %s14, 1
    %s20 = ssub.s32 %s14, 2
    %s27 = sadd.s32 1, %s22
    %p28 = scmp.ge.s32.totalorder %s27, 4
    %s29 = scalar_select %p28, 0, %s27
    %s30 = sadd.s32 1, %s21
    %s31 = scalar_select %p28, %s30, %s21
    %p32 = scmp.ge.s32.totalorder %s31, 2
    %s33 = scalar_select %p32, 0, %s31
    %s34 = ssub.s32 %s21, %s33
    %s35 = ssub.s32 %s22, %s29
    %s36 = sor.u32 %s34, %s35
    %p37 = scmp.eq.s32.totalorder %s36, 0
    %s39 = sadd.s32 %s38, 1
    %s40 = scalar_select %p37, %s38, %s39
    %p43 = pneg %p37
    %p44 = scmp.eq.s32.totalorder %s14, 7
    %p45 = por %p43, %p44
    %p46 = scmp.ne.s32.totalorder %s38, %s41
    %p47 = scmp.eq.s32.totalorder %s14, 0
    %p48 = por %p46, %p47
    %p49 = scmp.ne.s32.totalorder %s38, %s41
    %p50 = scmp.eq.s32.totalorder %s19, 7
    %p51 = por %p49, %p50
    %p52 = scmp.ne.s32.totalorder %s41, %s42
    %p53 = scmp.eq.s32.totalorder %s19, 0
    %p54 = por %p52, %p53
    %p55 = scmp.ne.s32.totalorder %s41, %s42
    %p56 = scmp.eq.s32.totalorder %s20, 7
    %p57 = por %p55, %p56
    %p59 = scmp.ne.s32.totalorder %s42, %s58
    %p60 = scmp.eq.s32.totalorder %s20, 0
    %p61 = por %p59, %p60
    %s63 = sadd.s32 %s62, 1
    %p66 = scmp.eq.s32.totalorder %s14, 7
    %p67 = scmp.ne.s32.totalorder %s62, %s64
    %p68 = scmp.eq.s32.totalorder %s14, 0
    %p69 = por %p67, %p68
    %p70 = scmp.ne.s32.totalorder %s62, %s64
    %p71 = scmp.eq.s32.totalorder %s19, 7
    %p72 = por %p70, %p71
    %p73 = scmp.ne.s32.totalorder %s64, %s65
    %p74 = scmp.eq.s32.totalorder %s19, 0
    %p75 = por %p73, %p74
    %p76 = scmp.ne.s32.totalorder %s64, %s65
    %p77 = scmp.eq.s32.totalorder %s20, 7
    %p78 = por %p76, %p77
    %p80 = scmp.ne.s32.totalorder %s65, %s79
    %p81 = scmp.eq.s32.totalorder %s20, 0
    %p82 = por %p80, %p81
    %s84 = sadd.s32 %s83, 1
    %p87 = scmp.eq.s32.totalorder %s14, 7
    %p88 = scmp.ne.s32.totalorder %s83, %s85
    %p89 = scmp.eq.s32.totalorder %s14, 0
    %p90 = por %p88, %p89
    %p91 = scmp.ne.s32.totalorder %s83, %s85
    %p92 = scmp.eq.s32.totalorder %s19, 7
    %p93 = por %p91, %p92
    %p94 = scmp.ne.s32.totalorder %s85, %s86
    %p95 = scmp.eq.s32.totalorder %s19, 0
    %p96 = por %p94, %p95
    %p97 = scmp.ne.s32.totalorder %s85, %s86
    %p98 = scmp.eq.s32.totalorder %s20, 7
    %p99 = por %p97, %p98
    %p101 = scmp.ne.s32.totalorder %s86, %s100
    %p102 = scmp.eq.s32.totalorder %s20, 0
    %p103 = por %p101, %p102
    %s105 = sadd.s32 %s104, 1
    %p108 = scmp.eq.s32.totalorder %s14, 7
    %p109 = scmp.ne.s32.totalorder %s104, %s106
    %p110 = scmp.eq.s32.totalorder %s14, 0
    %p111 = por %p109, %p110
    %p112 = scmp.ne.s32.totalorder %s104, %s106
    %p113 = scmp.eq.s32.totalorder %s19, 7
    %p114 = por %p112, %p113
    %p115 = scmp.ne.s32.totalorder %s106, %s107
    %p116 = scmp.eq.s32.totalorder %s19, 0
    %p117 = por %p115, %p116
    %p118 = scmp.ne.s32.totalorder %s106, %s107
    %p119 = scmp.eq.s32.totalorder %s20, 7
    %p120 = por %p118, %p119
    %p122 = scmp.ne.s32.totalorder %s107, %s121
    %p123 = scmp.eq.s32.totalorder %s20, 0
    %p124 = por %p122, %p123
    %s126 = sadd.s32 %s125, 1
    %p129 = scmp.eq.s32.totalorder %s14, 7
    %p130 = scmp.ne.s32.totalorder %s125, %s127
    %p131 = scmp.eq.s32.totalorder %s14, 0
    %p132 = por %p130, %p131
    %p133 = scmp.ne.s32.totalorder %s125, %s127
    %p134 = scmp.eq.s32.totalorder %s19, 7
    %p135 = por %p133, %p134
    %p136 = scmp.ne.s32.totalorder %s127, %s128
    %p137 = scmp.eq.s32.totalorder %s19, 0
    %p138 = por %p136, %p137
    %p139 = scmp.ne.s32.totalorder %s127, %s128
    %p140 = scmp.eq.s32.totalorder %s20, 7
    %p141 = por %p139, %p140
    %p143 = scmp.ne.s32.totalorder %s128, %s142
    %p144 = scmp.eq.s32.totalorder %s20, 0
    %p145 = por %p143, %p144
    %s147 = sadd.s32 %s146, 1
    %p150 = scmp.eq.s32.totalorder %s14, 7
    %p151 = scmp.ne.s32.totalorder %s146, %s148
    %p152 = scmp.eq.s32.totalorder %s14, 0
    %p153 = por %p151, %p152
    %p154 = scmp.ne.s32.totalorder %s146, %s148
    %p155 = scmp.eq.s32.totalorder %s19, 7
    %p156 = por %p154, %p155
    %p157 = scmp.ne.s32.totalorder %s148, %s149
    %p158 = scmp.eq.s32.totalorder %s19, 0
    %p159 = por %p157, %p158
    %p160 = scmp.ne.s32.totalorder %s148, %s149
    %p161 = scmp.eq.s32.totalorder %s20, 7
    %p162 = por %p160, %p161
    %p164 = scmp.ne.s32.totalorder %s149, %s163
    %p165 = scmp.eq.s32.totalorder %s20, 0
    %p166 = por %p164, %p165
    %s168 = sadd.s32 %s167, 1
    %p171 = scmp.eq.s32.totalorder %s14, 7
    %p172 = scmp.ne.s32.totalorder %s167, %s169
    %p173 = scmp.eq.s32.totalorder %s14, 0
    %p174 = por %p172, %p173
    %p175 = scmp.ne.s32.totalorder %s167, %s169
    %p176 = scmp.eq.s32.totalorder %s19, 7
    %p177 = por %p175, %p176
    %p178 = scmp.ne.s32.totalorder %s169, %s170
    %p179 = scmp.eq.s32.totalorder %s19, 0
    %p180 = por %p178, %p179
    %p181 = scmp.ne.s32.totalorder %s169, %s170
    %p182 = scmp.eq.s32.totalorder %s20, 7
    %p183 = por %p181, %p182
    %p185 = scmp.ne.s32.totalorder %s170, %s184
    %p186 = scmp.eq.s32.totalorder %s20, 0
    %p187 = por %p185, %p186
    %s189 = sadd.s32 %s188, 1
    %p192 = scmp.eq.s32.totalorder %s14, 7
    %p193 = scmp.ne.s32.totalorder %s188, %s190
    %p194 = scmp.eq.s32.totalorder %s14, 0
    %p195 = por %p193, %p194
    %p196 = scmp.ne.s32.totalorder %s188, %s190
    %p197 = scmp.eq.s32.totalorder %s19, 7
    %p198 = por %p196, %p197
    %p199 = scmp.ne.s32.totalorder %s190, %s191
    %p200 = scmp.eq.s32.totalorder %s19, 0
    %p201 = por %p199, %p200
    %p202 = scmp.ne.s32.totalorder %s190, %s191
    %p203 = scmp.eq.s32.totalorder %s20, 7
    %p204 = por %p202, %p203
    %p206 = scmp.ne.s32.totalorder %s191, %s205
    %p207 = scmp.eq.s32.totalorder %s20, 0
    %p208 = por %p206, %p207
    %s209 = ssub.s32 %s21, %s33
    %s210 = ssub.s32 %s22, %s29
    %s211 = sor.u32 %s209, %s210
    %p212 = scmp.eq.s32.totalorder %s211, 0
    %s214 = sadd.s32 %s213, 1
    %s215 = scalar_select %p212, %s213, %s214
    %p218 = pneg %p212
    %p219 = scmp.eq.s32.totalorder %s14, 7
    %p220 = por %p218, %p219
    %p221 = scmp.ne.s32.totalorder %s213, %s216
    %p222 = scmp.eq.s32.totalorder %s14, 0
    %p223 = por %p221, %p222
    %p224 = scmp.ne.s32.totalorder %s213, %s216
    %p225 = scmp.eq.s32.totalorder %s19, 7
    %p226 = por %p224, %p225
    %p227 = scmp.ne.s32.totalorder %s216, %s217
    %p228 = scmp.eq.s32.totalorder %s19, 0
    %p229 = por %p227, %p228
    %p230 = scmp.ne.s32.totalorder %s216, %s217
    %p231 = scmp.eq.s32.totalorder %s20, 7
    %p232 = por %p230, %p231
    %p234 = scmp.ne.s32.totalorder %s217, %s233
    %p235 = scmp.eq.s32.totalorder %s20, 0
    %p236 = por %p234, %p235
    %p237 = scmp.le.s32.totalorder 1, %s14
    %p238 = scmp.lt.s32.totalorder %s14, 9
    %p239 = pnand %p237, %p238
    %p240 = pneg %p239
    // Predicated region
    $region9: #{conv_up_block_forward.1} parent=5 // pred_check
      _
    $region10: #{conv_up_block_forward.1} parent=5 // pred_check_branch
      %242 = sbr.rel (%p239) target = $region12
    $region11: #{conv_up_block_forward.1} parent=5 // pred_region
      %s243 = ssub.s32 %s14, 1
      // Predicated region
      $region13: #{conv_up_block_forward.1} parent=11 // pred_check
        %p244 = pneg %p75
      $region14: #{conv_up_block_forward.1} parent=11 // pred_check_branch
        %246 = sbr.rel (%p244) target = $region16
      $region15: #{conv_up_block_forward.1} parent=11 // pred_region
        _
      $region16: #{conv_up_block_forward.1} parent=11 // pred_fallthru
        _
      // Predicated region
      $region17: #{conv_up_block_forward.1} parent=11 // pred_check
        %p247 = pneg %p96
      $region18: #{conv_up_block_forward.1} parent=11 // pred_check_branch
        %249 = sbr.rel (%p247) target = $region20
      $region19: #{conv_up_block_forward.1} parent=11 // pred_region
        _
      $region20: #{conv_up_block_forward.1} parent=11 // pred_fallthru
        _
      // Predicated region
      $region21: #{conv_up_block_forward.1} parent=11 // pred_check
        %p250 = pneg %p117
      $region22: #{conv_up_block_forward.1} parent=11 // pred_check_branch
        %252 = sbr.rel (%p250) target = $region24
      $region23: #{conv_up_block_forward.1} parent=11 // pred_region
        _
      $region24: #{conv_up_block_forward.1} parent=11 // pred_fallthru
        _
      // Predicated region
      $region25: #{conv_up_block_forward.1} parent=11 // pred_check
        %p253 = pneg %p138
      $region26: #{conv_up_block_forward.1} parent=11 // pred_check_branch
        %255 = sbr.rel (%p253) target = $region28
      $region27: #{conv_up_block_forward.1} parent=11 // pred_region
        _
      $region28: #{conv_up_block_forward.1} parent=11 // pred_fallthru
        _
      // Predicated region
      $region29: #{conv_up_block_forward.1} parent=11 // pred_check
        %p256 = pneg %p159
      $region30: #{conv_up_block_forward.1} parent=11 // pred_check_branch
        %258 = sbr.rel (%p256) target = $region32
      $region31: #{conv_up_block_forward.1} parent=11 // pred_region
        _
      $region32: #{conv_up_block_forward.1} parent=11 // pred_fallthru
        _
      // Predicated region
      $region33: #{conv_up_block_forward.1} parent=11 // pred_check
        %p259 = pneg %p180
      $region34: #{conv_up_block_forward.1} parent=11 // pred_check_branch
        %261 = sbr.rel (%p259) target = $region36
      $region35: #{conv_up_block_forward.1} parent=11 // pred_region
        _
      $region36: #{conv_up_block_forward.1} parent=11 // pred_fallthru
        _
      // Predicated region
      $region37: #{conv_up_block_forward.1} parent=11 // pred_check
        %p262 = pneg %p201
      $region38: #{conv_up_block_forward.1} parent=11 // pred_check_branch
        %264 = sbr.rel (%p262) target = $region40
      $region39: #{conv_up_block_forward.1} parent=11 // pred_region
        _
      $region40: #{conv_up_block_forward.1} parent=11 // pred_fallthru
        _
    $region12: #{conv_up_block_forward.1} parent=5 // pred_fallthru
      _
    %p265 = scmp.lt.s32.totalorder %s14, 8
    // Predicated region
    $region41: #{conv_up_block_forward.1} parent=5 // pred_check
      %p266 = pneg %p265
    $region42: #{conv_up_block_forward.1} parent=5 // pred_check_branch
      %268 = sbr.rel (%p266) target = $region44
    $region43: #{conv_up_block_forward.1} parent=5 // pred_region
      // Predicated region
      $region45: #{conv_up_block_forward.1} parent=43 // pred_check
        %p269 = pneg %p48
      $region46: #{conv_up_block_forward.1} parent=43 // pred_check_branch
        %271 = sbr.rel (%p269) target = $region48
      $region47: #{conv_up_block_forward.1} parent=43 // pred_region
        %p272 = scmp.lt.s32.totalorder %s21, 1
        %s273 = scalar_select %p272, %s21, 1
        %p274 = scmp.lt.s32.totalorder %s22, 3
        %s275 = scalar_select %p274, %s22, 3
        %s276 = smul.addr %s275, 3
        %s277 = smul.addr %s273, 12
        %s278 = sadd.s32 %s276, %s277
        %s279 = smul.addr %s278, 8
        %s280 = scalar_lea.vmem %s0, %s279
      $region48: #{conv_up_block_forward.1} parent=43 // pred_fallthru
        _
    $region44: #{conv_up_block_forward.1} parent=5 // pred_fallthru
      _
    %p281 = scmp.le.s32.totalorder 1, %s14
    %p282 = scmp.lt.s32.totalorder %s14, 9
    %p283 = pnand %p281, %p282
    %p284 = pneg %p283
    // Predicated region
    $region49: #{conv_up_block_forward.1} parent=5 // pred_check
      _
    $region50: #{conv_up_block_forward.1} parent=5 // pred_check_branch
      %286 = sbr.rel (%p283) target = $region52
    $region51: #{conv_up_block_forward.1} parent=5 // pred_region
      %s287 = ssub.s32 %s14, 1
      %p288 = scmp.lt.s32.totalorder %s23, 1
      %s289 = scalar_select %p288, %s23, 1
      %p290 = scmp.lt.s32.totalorder %s24, 3
      %s291 = scalar_select %p290, %s24, 3
      %s292 = smul.addr %s291, 3
      %s293 = smul.addr %s289, 12
      %s294 = sadd.s32 %s292, %s293
      %s295 = smul.addr %s294, 8
      %s296 = scalar_lea.vmem %s0, %s295
      %p297 = pneg %p54
      %p298 = pneg %p51
      %p299 = pneg %p75
      %p300 = pneg %p72
      %p301 = pneg %p96
      %p302 = pneg %p93
      %p303 = pneg %p117
      %p304 = pneg %p114
      %p305 = pneg %p138
      %p306 = pneg %p135
      %p307 = pneg %p159
      %p308 = pneg %p156
      %p309 = pneg %p180
      %p310 = pneg %p177
      %p311 = pneg %p201
      %p312 = pneg %p198
      %p313 = pneg %p229
      %p314 = pneg %p226
      %p315 = scmp.lt.s32.totalorder %s23, 1
      %s316 = scalar_select %p315, %s23, 1
      %p317 = scmp.lt.s32.totalorder %s24, 3
      %s318 = scalar_select %p317, %s24, 3
      %s319 = smul.addr %s318, 2
      %s320 = smul.addr %s316, 8
      %s321 = sadd.s32 %s319, %s320
      %s322 = smul.addr %s321, 8
      %s323 = scalar_lea.vmem %s8, %s322
      %p324 = scmp.lt.s32.totalorder %s23, 1
      %s325 = scalar_select %p324, %s23, 1
      %p326 = scmp.lt.s32.totalorder %s24, 3
      %s327 = scalar_select %p326, %s24, 3
      %s328 = smul.addr %s327, 3
      %s329 = smul.addr %s325, 12
      %s330 = sadd.s32 %s328, %s329
      %s331 = smul.addr %s330, 8
      %s332 = scalar_lea.vmem %s0, %s331
      %p333 = scmp.lt.s32.totalorder %s23, 1
      %s334 = scalar_select %p333, %s23, 1
      %p335 = scmp.lt.s32.totalorder %s24, 3
      %s336 = scalar_select %p335, %s24, 3
      %s337 = smul.addr %s336, 2
      %s338 = smul.addr %s334, 8
      %s339 = sadd.s32 %s337, %s338
      %s340 = smul.addr %s339, 8
      %s341 = scalar_lea.vmem %s8, %s340
      %v342 = vld [vmem:[%s332] sm:$0xff]
      %v343 = vld [vmem:[%s332 + $0x8] sm:$0xff]
      %v344 = vld [vmem:[%s332 + $0x10] sm:$0xff]
      %v345 = vld [vmem:[%s1] sm:$0x7]
      %vm346 = vcmp.ge.s32.totalorder %v345, 1
      %vm347 = vcmp.lt.s32.totalorder %v345, 31
      %348 = vrot.lane.b32.xlu0 %v342, 33
      %v349 = vpop.permute.xlu0 %348
      %350 = vrot.lane.b32.xlu0 %v343, 33
      %v351 = vpop.permute.xlu0 %350
      %352 = vrot.lane.b32.xlu0 %v344, 33
      %v353 = vpop.permute.xlu0 %352
      %v354 = vlaneseq
      %v355 = vand.u32 %v354, 127
      %vm356 = vcmp.lt.s32.totalorder %v355, 33
      %v357 = vsel %vm356, %v351, %v353
      %v358 = vsel %vm356, %v349, %v351
      %v359 = vsel %vm356, %v353, %v349
      %v360 = vsel %vm346, 1, 0
      %v361 = vlaneseq
      %v362 = vshrl.u32 %v361, 7
      %v363 = vsub.s32 0, %v362
      %v364 = vrot.slane %v360, %v363
      %v365 = vlaneseq
      %v366 = vshrl.u32 %v365, 7
      %v367 = vsub.s32 1, %v366
      %v368 = vrot.slane %v360, %v367
      %v369 = vlaneseq
      %v370 = vshrl.u32 %v369, 7
      %v371 = vsub.s32 2, %v370
      %v372 = vrot.slane %v360, %v371
      %vm373 = vcmp.eq.s32.totalorder %v364, 1
      %vm374 = vcmp.eq.s32.totalorder %v368, 1
      %vm375 = vcmp.eq.s32.totalorder %v372, 1
      %v376 = vsel %vm373, %v359, 0.0
      %v377 = vsel %vm374, %v358, 0.0
      %v378 = vsel %vm375, %v357, 0.0
      %379 = vst [vmem:[#allocation2] sm:$0xff] %v376
      %380 = vst [vmem:[#allocation2 + $0x8] sm:$0xff] %v377
      %381 = vst [vmem:[#allocation2 + $0x10] sm:$0xff] %v378
      %382 = vrot.lane.b32.xlu0 %v342, 32
      %v383 = vpop.permute.xlu0 %382
      %384 = vrot.lane.b32.xlu0 %v343, 32
      %v385 = vpop.permute.xlu0 %384
      %386 = vrot.lane.b32.xlu0 %v344, 32
      %v387 = vpop.permute.xlu0 %386
      %vm388 = vcmp.lt.s32.totalorder %v355, 32
      %v389 = vsel %vm388, %v385, %v387
      %v390 = vsel %vm388, %v383, %v385
      %v391 = vsel %vm388, %v387, %v383
      %392 = vst [vmem:[#allocation2 + $0x18] sm:$0xff] %v391
      %393 = vst [vmem:[#allocation2 + $0x20] sm:$0xff] %v390
      %394 = vst [vmem:[#allocation2 + $0x28] sm:$0xff] %v389
      %395 = vrot.lane.b32.xlu0 %v342, 31
      %v396 = vpop.permute.xlu0 %395
      %397 = vrot.lane.b32.xlu0 %v343, 31
      %v398 = vpop.permute.xlu0 %397
      %399 = vrot.lane.b32.xlu0 %v344, 31
      %v400 = vpop.permute.xlu0 %399
      %vm401 = vcmp.lt.s32.totalorder %v355, 31
      %v402 = vsel %vm401, %v398, %v400
      %v403 = vsel %vm401, %v396, %v398
      %v404 = vsel %vm401, %v400, %v396
      %v405 = vsel %vm347, 1, 0
      %v406 = vlaneseq
      %v407 = vshrl.u32 %v406, 7
      %v408 = vsub.s32 0, %v407
      %v409 = vrot.slane %v405, %v408
      %v410 = vlaneseq
      %v411 = vshrl.u32 %v410, 7
      %v412 = vsub.s32 1, %v411
      %v413 = vrot.slane %v405, %v412
      %v414 = vlaneseq
      %v415 = vshrl.u32 %v414, 7
      %v416 = vsub.s32 2, %v415
      %v417 = vrot.slane %v405, %v416
      %vm418 = vcmp.eq.s32.totalorder %v409, 1
      %vm419 = vcmp.eq.s32.totalorder %v413, 1
      %vm420 = vcmp.eq.s32.totalorder %v417, 1
      %v421 = vsel %vm418, %v404, 0.0
      %v422 = vsel %vm419, %v403, 0.0
      %v423 = vsel %vm420, %v402, 0.0
      %424 = vst [vmem:[#allocation2 + $0x30] sm:$0xff] %v421
      %425 = vst [vmem:[#allocation2 + $0x38] sm:$0xff] %v422
      %426 = vst [vmem:[#allocation2 + $0x40] sm:$0xff] %v423
      %427 = vrot.lane.b32.xlu0 %v342, 1
      %v428 = vpop.permute.xlu0 %427
      %429 = vrot.lane.b32.xlu0 %v343, 1
      %v430 = vpop.permute.xlu0 %429
      %431 = vrot.lane.b32.xlu0 %v344, 1
      %v432 = vpop.permute.xlu0 %431
      %vm433 = vcmp.lt.s32.totalorder %v355, 1
      %v434 = vsel %vm433, %v430, %v432
      %v435 = vsel %vm433, %v428, %v430
      %v436 = vsel %vm433, %v432, %v428
      %v437 = vsel %vm373, %v436, 0.0
      %v438 = vsel %vm374, %v435, 0.0
      %v439 = vsel %vm375, %v434, 0.0
      %440 = vst [vmem:[#allocation2 + $0x48] sm:$0xff] %v437
      %441 = vst [vmem:[#allocation2 + $0x50] sm:$0xff] %v438
      %442 = vst [vmem:[#allocation2 + $0x58] sm:$0xff] %v439
      %443 = vst [vmem:[#allocation2 + $0x60] sm:$0xff] %v342
      %444 = vst [vmem:[#allocation2 + $0x68] sm:$0xff] %v343
      %445 = vst [vmem:[#allocation2 + $0x70] sm:$0xff] %v344
      %446 = vrot.lane.b32.xlu0 %v342, 127
      %v447 = vpop.permute.xlu0 %446
      %448 = vrot.lane.b32.xlu0 %v343, 127
      %v449 = vpop.permute.xlu0 %448
      %450 = vrot.lane.b32.xlu0 %v344, 127
      %v451 = vpop.permute.xlu0 %450
      %vm452 = vcmp.lt.s32.totalorder %v355, 127
      %v453 = vsel %vm452, %v449, %v451
      %v454 = vsel %vm452, %v447, %v449
      %v455 = vsel %vm452, %v451, %v447
      %v456 = vsel %vm418, %v454, 0.0
      %v457 = vsel %vm419, %v453, 0.0
      %v458 = vsel %vm420, %v455, 0.0
      %459 = vst [vmem:[#allocation2 + $0x78] sm:$0xff] %v456
      %460 = vst [vmem:[#allocation2 + $0x80] sm:$0xff] %v457
      %461 = vst [vmem:[#allocation2 + $0x88] sm:$0xff] %v458
      %462 = vrot.lane.b32.xlu0 %v342, 97
      %v463 = vpop.permute.xlu0 %462
      %464 = vrot.lane.b32.xlu0 %v343, 97
      %v465 = vpop.permute.xlu0 %464
      %466 = vrot.lane.b32.xlu0 %v344, 97
      %v467 = vpop.permute.xlu0 %466
      %vm468 = vcmp.lt.s32.totalorder %v355, 97
      %v469 = vsel %vm468, %v465, %v467
      %v470 = vsel %vm468, %v463, %v465
      %v471 = vsel %vm468, %v467, %v463
      %v472 = vsel %vm373, %v470, 0.0
      %v473 = vsel %vm374, %v469, 0.0
      %v474 = vsel %vm375, %v471, 0.0
      %475 = vst [vmem:[#allocation2 + $0x90] sm:$0xff] %v472
      %476 = vst [vmem:[#allocation2 + $0x98] sm:$0xff] %v473
      %477 = vst [vmem:[#allocation2 + $0xa0] sm:$0xff] %v474
      %478 = vrot.lane.b32.xlu0 %v342, 96
      %v479 = vpop.permute.xlu0 %478
      %480 = vrot.lane.b32.xlu0 %v343, 96
      %v481 = vpop.permute.xlu0 %480
      %482 = vrot.lane.b32.xlu0 %v344, 96
      %v483 = vpop.permute.xlu0 %482
      %vm484 = vcmp.lt.s32.totalorder %v355, 96
      %v485 = vsel %vm484, %v481, %v483
      %v486 = vsel %vm484, %v479, %v481
      %v487 = vsel %vm484, %v483, %v479
      %488 = vst [vmem:[#allocation2 + $0xa8] sm:$0xff] %v486
      %489 = vst [vmem:[#allocation2 + $0xb0] sm:$0xff] %v485
      %490 = vst [vmem:[#allocation2 + $0xb8] sm:$0xff] %v487
      %491 = vrot.lane.b32.xlu0 %v342, 95
      %v492 = vpop.permute.xlu0 %491
      %493 = vrot.lane.b32.xlu0 %v343, 95
      %v494 = vpop.permute.xlu0 %493
      %495 = vrot.lane.b32.xlu0 %v344, 95
      %v496 = vpop.permute.xlu0 %495
      %vm497 = vcmp.lt.s32.totalorder %v355, 95
      %v498 = vsel %vm497, %v494, %v496
      %v499 = vsel %vm497, %v492, %v494
      %v500 = vsel %vm497, %v496, %v492
      %v501 = vsel %vm418, %v499, 0.0
      %v502 = vsel %vm419, %v498, 0.0
      %v503 = vsel %vm420, %v500, 0.0
      %504 = vst [vmem:[#allocation2 + $0xc0] sm:$0xff] %v501
      %505 = vst [vmem:[#allocation2 + $0xc8] sm:$0xff] %v502
      %506 = vst [vmem:[#allocation2 + $0xd0] sm:$0xff] %v503
      %v507 = vld [vmem:[%s3] sm:$0xff]
      %v508 = vld [vmem:[#allocation2] sm:$0xff]
      %v509 = vld [vmem:[#allocation2 + $0x8] sm:$0xff]
      %v510 = vld [vmem:[#allocation2 + $0x10] sm:$0xff]
      %v511 = vld [vmem:[#allocation2 + $0x18] sm:$0xff]
      %v512 = vld [vmem:[#allocation2 + $0x20] sm:$0xff]
      %v513 = vld [vmem:[#allocation2 + $0x28] sm:$0xff]
      %v514 = vld [vmem:[#allocation2 + $0x30] sm:$0xff]
      %v515 = vld [vmem:[#allocation2 + $0x38] sm:$0xff]
      %v516 = vld [vmem:[#allocation2 + $0x40] sm:$0xff]
      %v517 = vld [vmem:[#allocation2 + $0x48] sm:$0xff]
      %v518 = vld [vmem:[#allocation2 + $0x50] sm:$0xff]
      %v519 = vld [vmem:[#allocation2 + $0x58] sm:$0xff]
      %v520 = vld [vmem:[#allocation2 + $0x60] sm:$0xff]
      %v521 = vld [vmem:[#allocation2 + $0x68] sm:$0xff]
      %v522 = vld [vmem:[#allocation2 + $0x70] sm:$0xff]
      %v523 = vld [vmem:[#allocation2 + $0x78] sm:$0xff]
      %v524 = vld [vmem:[#allocation2 + $0x80] sm:$0xff]
      %v525 = vld [vmem:[#allocation2 + $0x88] sm:$0xff]
      %v526 = vld [vmem:[#allocation2 + $0x90] sm:$0xff]
      %v527 = vld [vmem:[#allocation2 + $0x98] sm:$0xff]
      %v528 = vld [vmem:[#allocation2 + $0xa0] sm:$0xff]
      %v529 = vld [vmem:[#allocation2 + $0xa8] sm:$0xff]
      %v530 = vld [vmem:[#allocation2 + $0xb0] sm:$0xff]
      %v531 = vld [vmem:[#allocation2 + $0xb8] sm:$0xff]
      %v532 = vld [vmem:[#allocation2 + $0xc0] sm:$0xff]
      %v533 = vld [vmem:[#allocation2 + $0xc8] sm:$0xff]
      %v534 = vld [vmem:[#allocation2 + $0xd0] sm:$0xff]
      %v535 = vld [vmem:[%s6] sm:$0xff]
      %537 = vset.pattern.permute.xlu0 0
      %538 = vperm.xlu0 %537, %v535
      %v539 = vpop.permute.xlu0 %538
      %vm541 = vcmask 588800
      %v543 = vsel %vm541, %v507, 0
      %545 = vmatprep.subr.mxu0 %v509
      %546 = vmatpush1.msra.mxu0 %v508
      %547 = vmatprep.subr.mxu0 %v512
      %548 = vmatpush1.msra.mxu0 %v511
      %549 = vmatprep.subr.mxu0 %v515
      %550 = vmatpush1.msra.mxu0 %v514
      %551 = vmatprep.subr.mxu0 %v518
      %552 = vmatpush1.msra.mxu0 %v517
      %553 = vmatprep.subr.mxu0 %v521
      %554 = vmatpush1.msra.mxu0 %v520
      %555 = vmatprep.subr.mxu0 %v524
      %556 = vmatpush1.msra.mxu0 %v523
      %557 = vmatprep.subr.mxu0 %v527
      %558 = vmatpush1.msra.mxu0 %v526
      %559 = vmatprep.subr.mxu0 %v530
      %560 = vmatpush1.msra.mxu0 %v529
      %561 = vmatprep.subr.mxu0 %v533
      %562 = vmatpush1.msra.mxu0 %v532
      %563 = vmatprep.subr.mxu0 0.0
      %564 = vmatpush1.msra.mxu0 0.0
      %565 = vmatprep.subr.mxu0 0.0
      %566 = vmatpush1.msra.mxu0 0.0
      %567 = vmatprep.subr.mxu0 0.0
      %568 = vmatpush1.msra.mxu0 0.0
      %569 = vmatprep.subr.mxu0 0.0
      %570 = vmatpush1.msra.mxu0 0.0
      %571 = vmatprep.subr.mxu0 0.0
      %572 = vmatpush1.msra.mxu0 0.0
      %573 = vmatprep.subr.mxu0 0.0
      %574 = vmatpush1.msra.mxu0 0.0
      %575 = vmatprep.subr.mxu0 0.0
      %576 = vmatpush1.msra.mxu0 0.0
      %577 = vmatprep.subr.mxu0 0.0
      %578 = vmatpush1.msra.mxu0 0.0
      %579 = vmatprep.subr.mxu0 0.0
      %580 = vmatpush1.msra.mxu0 0.0
      %581 = vmatprep.subr.mxu0 0.0
      %582 = vmatpush1.msra.mxu0 0.0
      %583 = vmatprep.subr.mxu0 0.0
      %584 = vmatpush1.msra.mxu0 0.0
      %585 = vmatprep.subr.mxu0 0.0
      %586 = vmatpush1.msra.mxu0 0.0
      %587 = vmatprep.subr.mxu0 0.0
      %588 = vmatpush1.msra.mxu0 0.0
      %589 = vmatprep.subr.mxu0 0.0
      %590 = vmatpush1.msra.mxu0 0.0
      %591 = vmatprep.subr.mxu0 0.0
      %592 = vmatpush1.msra.mxu0 0.0
      %593 = vmatprep.subr.mxu0 0.0
      %594 = vmatpush1.msra.mxu0 0.0
      %595 = vmatprep.subr.mxu0 0.0
      %596 = vmatpush1.msra.mxu0 0.0
      %597 = vmatprep.subr.mxu0 0.0
      %598 = vmatpush1.msra.mxu0 0.0
      %599 = vmatprep.subr.mxu0 0.0
      %600 = vmatpush1.msra.mxu0 0.0
      %601 = vmatprep.subr.mxu0 0.0
      %602 = vmatpush1.msra.mxu0 0.0
      %603 = vmatprep.subr.mxu0 0.0
      %604 = vmatpush1.msra.mxu0 0.0
      %605 = vmatprep.subr.mxu0 0.0
      %606 = vmatpush1.msra.mxu0 0.0
      %607 = vmatprep.subr.mxu0 0.0
      %608 = vmatpush1.msra.mxu0 0.0
      %609 = vmatprep.mubr.f32.mxu0 0.0
      %610 = vmatmul.mubr.f32.gmra.mrb[0].mxu0 %v543
      %v611 = vpop.f32.mrb[0].mxu0
      %v612 = vadd.f32 %v539, %v611
      %v613 = vpop.f32.mrb[0].mxu0
      %v614 = vadd.f32 %v539, %v613
      %615 = vdwg.mxu0
      %616 = vmatprep.subr.mxu0 0.0
      %617 = vmatpush1.msra.mxu0 %v510
      %618 = vmatprep.subr.mxu0 0.0
      %619 = vmatpush1.msra.mxu0 %v513
      %620 = vmatprep.subr.mxu0 0.0
      %621 = vmatpush1.msra.mxu0 %v516
      %622 = vmatprep.subr.mxu0 0.0
      %623 = vmatpush1.msra.mxu0 %v519
      %624 = vmatprep.subr.mxu0 0.0
      %625 = vmatpush1.msra.mxu0 %v522
      %626 = vmatprep.subr.mxu0 0.0
      %627 = vmatpush1.msra.mxu0 %v525
      %628 = vmatprep.subr.mxu0 0.0
      %629 = vmatpush1.msra.mxu0 %v528
      %630 = vmatprep.subr.mxu0 0.0
      %631 = vmatpush1.msra.mxu0 %v531
      %632 = vmatprep.subr.mxu0 0.0
      %633 = vmatpush1.msra.mxu0 %v534
      %634 = vmatprep.subr.mxu0 0.0
      %635 = vmatpush1.msra.mxu0 0.0
      %636 = vmatprep.subr.mxu0 0.0
      %637 = vmatpush1.msra.mxu0 0.0
      %638 = vmatprep.subr.mxu0 0.0
      %639 = vmatpush1.msra.mxu0 0.0
      %640 = vmatprep.subr.mxu0 0.0
      %641 = vmatpush1.msra.mxu0 0.0
      %642 = vmatprep.subr.mxu0 0.0
      %643 = vmatpush1.msra.mxu0 0.0
      %644 = vmatprep.subr.mxu0 0.0
      %645 = vmatpush1.msra.mxu0 0.0
      %646 = vmatprep.subr.mxu0 0.0
      %647 = vmatpush1.msra.mxu0 0.0
      %648 = vmatprep.subr.mxu0 0.0
      %649 = vmatpush1.msra.mxu0 0.0
      %650 = vmatprep.subr.mxu0 0.0
      %651 = vmatpush1.msra.mxu0 0.0
      %652 = vmatprep.subr.mxu0 0.0
      %653 = vmatpush1.msra.mxu0 0.0
      %654 = vmatprep.subr.mxu0 0.0
      %655 = vmatpush1.msra.mxu0 0.0
      %656 = vmatprep.subr.mxu0 0.0
      %657 = vmatpush1.msra.mxu0 0.0
      %658 = vmatprep.subr.mxu0 0.0
      %659 = vmatpush1.msra.mxu0 0.0
      %660 = vmatprep.subr.mxu0 0.0
      %661 = vmatpush1.msra.mxu0 0.0
      %662 = vmatprep.subr.mxu0 0.0
      %663 = vmatpush1.msra.mxu0 0.0
      %664 = vmatprep.subr.mxu0 0.0
      %665 = vmatpush1.msra.mxu0 0.0
      %666 = vmatprep.subr.mxu0 0.0
      %667 = vmatpush1.msra.mxu0 0.0
      %668 = vmatprep.subr.mxu0 0.0
      %669 = vmatpush1.msra.mxu0 0.0
      %670 = vmatprep.subr.mxu0 0.0
      %671 = vmatpush1.msra.mxu0 0.0
      %672 = vmatprep.subr.mxu0 0.0
      %673 = vmatpush1.msra.mxu0 0.0
      %674 = vmatprep.subr.mxu0 0.0
      %675 = vmatpush1.msra.mxu0 0.0
      %676 = vmatprep.subr.mxu0 0.0
      %677 = vmatpush1.msra.mxu0 0.0
      %678 = vmatprep.subr.mxu0 0.0
      %679 = vmatpush1.msra.mxu0 0.0
      %680 = vmatprep.mubr.f32.mxu0 0.0
      %681 = vmatmul.mubr.f32.gmra.mrb[0].mxu0 %v543
      %v682 = vpop.f32.mrb[0].mxu0
      %v683 = vadd.f32 %v539, %v682
      %v684 = vpop.f32.mrb[0].mxu0
      %685 = vdwg.mxu0
      %v686 = vmul.f32 %v612, 0.5
      %v687 = vmul.f32 %v614, 0.5
      %v688 = vmul.f32 %v683, 0.5
      %v689 = vmul.f32 %v612, 0.70710677
      %v690 = vmul.f32 %v614, 0.70710677
      %v691 = vmul.f32 %v683, 0.70710677
      %v692 = verf.f32.pop %v689
      %v693 = verf.f32.pop %v690
      %v694 = verf.f32.pop %v691
      %v695 = vadd.f32 %v692, 1.0
      %v696 = vadd.f32 %v693, 1.0
      %v697 = vadd.f32 %v694, 1.0
      %v698 = vmul.f32 %v686, %v695
      %v699 = vmul.f32 %v687, %v696
      %v700 = vmul.f32 %v688, %v697
      %s701 = smul.u32 %s24, 8
      %v702 = vld [vmem:[%s2] sm:$0x7]
      %v703 = vstv %s701
      %v704 = vadd.s32 %v703, %v702
      %v705 = vsub.s32 %v704, 2
      %vm706 = vcmp.ge.s32.totalorder %v705, 0
      %vm707 = vcmp.lt.s32.totalorder %v705, 32
      %vm708 = vmand %vm706, %vm707
      %v709 = vsel %vm708, 1, 0
      %v710 = vlaneseq
      %v711 = vshrl.u32 %v710, 7
      %v712 = vsub.s32 0, %v711
      %v713 = vrot.slane %v709, %v712
      %v714 = vlaneseq
      %v715 = vshrl.u32 %v714, 7
      %v716 = vsub.s32 1, %v715
      %v717 = vrot.slane %v709, %v716
      %v718 = vlaneseq
      %v719 = vshrl.u32 %v718, 7
      %v720 = vsub.s32 2, %v719
      %v721 = vrot.slane %v709, %v720
      %vm722 = vcmp.eq.s32.totalorder %v713, 1
      %vm723 = vcmp.eq.s32.totalorder %v717, 1
      %vm724 = vcmp.eq.s32.totalorder %v721, 1
      %v725 = vsel %vm722, %v698, 0.0
      %v726 = vsel %vm723, %v699, 0.0
      %v727 = vsel %vm724, %v700, 0.0
      %728 = vrot.lane.b32.xlu0 %v725, 97
      %v729 = vpop.permute.xlu0 %728
      %730 = vrot.lane.b32.xlu0 %v726, 97
      %v731 = vpop.permute.xlu0 %730
      %732 = vrot.lane.b32.xlu0 %v727, 97
      %v733 = vpop.permute.xlu0 %732
      %v734 = vsel %vm468, %v731, %v733
      %v735 = vsel %vm468, %v729, %v731
      %v736 = vsel %vm373, %v735, 0.0
      %v737 = vsel %vm374, %v734, 0.0
      %738 = vst [vmem:[#allocation2] sm:$0xff] %v736
      %739 = vst [vmem:[#allocation2 + $0x8] sm:$0xff] %v737
      %740 = vrot.lane.b32.xlu0 %v725, 96
      %v741 = vpop.permute.xlu0 %740
      %742 = vrot.lane.b32.xlu0 %v726, 96
      %v743 = vpop.permute.xlu0 %742
      %744 = vrot.lane.b32.xlu0 %v727, 96
      %v745 = vpop.permute.xlu0 %744
      %v746 = vsel %vm484, %v743, %v745
      %v747 = vsel %vm484, %v741, %v743
      %748 = vst [vmem:[#allocation2 + $0x18] sm:$0xff] %v747
      %749 = vst [vmem:[#allocation2 + $0x20] sm:$0xff] %v746
      %750 = vrot.lane.b32.xlu0 %v725, 95
      %v751 = vpop.permute.xlu0 %750
      %752 = vrot.lane.b32.xlu0 %v726, 95
      %v753 = vpop.permute.xlu0 %752
      %754 = vrot.lane.b32.xlu0 %v727, 95
      %v755 = vpop.permute.xlu0 %754
      %v756 = vsel %vm497, %v753, %v755
      %v757 = vsel %vm497, %v751, %v753
      %v758 = vsel %vm418, %v757, 0.0
      %v759 = vsel %vm419, %v756, 0.0
      %760 = vst [vmem:[#allocation2 + $0x30] sm:$0xff] %v758
      %761 = vst [vmem:[#allocation2 + $0x38] sm:$0xff] %v759
      %762 = vrot.lane.b32.xlu0 %v725, 65
      %v763 = vpop.permute.xlu0 %762
      %764 = vrot.lane.b32.xlu0 %v726, 65
      %v765 = vpop.permute.xlu0 %764
      %766 = vrot.lane.b32.xlu0 %v727, 65
      %v767 = vpop.permute.xlu0 %766
      %vm768 = vcmp.lt.s32.totalorder %v355, 65
      %v769 = vsel %vm768, %v765, %v767
      %v770 = vsel %vm768, %v763, %v765
      %v771 = vsel %vm373, %v770, 0.0
      %v772 = vsel %vm374, %v769, 0.0
      %773 = vst [vmem:[#allocation2 + $0x48] sm:$0xff] %v771
      %774 = vst [vmem:[#allocation2 + $0x50] sm:$0xff] %v772
      %775 = vrot.lane.b32.xlu0 %v725, 64
      %v776 = vpop.permute.xlu0 %775
      %777 = vrot.lane.b32.xlu0 %v726, 64
      %v778 = vpop.permute.xlu0 %777
      %779 = vrot.lane.b32.xlu0 %v727, 64
      %v780 = vpop.permute.xlu0 %779
      %vm781 = vcmp.lt.s32.totalorder %v355, 64
      %v782 = vsel %vm781, %v778, %v780
      %v783 = vsel %vm781, %v776, %v778
      %784 = vst [vmem:[#allocation2 + $0x60] sm:$0xff] %v783
      %785 = vst [vmem:[#allocation2 + $0x68] sm:$0xff] %v782
      %786 = vrot.lane.b32.xlu0 %v725, 63
      %v787 = vpop.permute.xlu0 %786
      %788 = vrot.lane.b32.xlu0 %v726, 63
      %v789 = vpop.permute.xlu0 %788
      %790 = vrot.lane.b32.xlu0 %v727, 63
      %v791 = vpop.permute.xlu0 %790
      %vm792 = vcmp.lt.s32.totalorder %v355, 63
      %v793 = vsel %vm792, %v789, %v791
      %v794 = vsel %vm792, %v787, %v789
      %v795 = vsel %vm418, %v794, 0.0
      %v796 = vsel %vm419, %v793, 0.0
      %797 = vst [vmem:[#allocation2 + $0x78] sm:$0xff] %v795
      %798 = vst [vmem:[#allocation2 + $0x80] sm:$0xff] %v796
      %799 = vrot.lane.b32.xlu0 %v725, 33
      %v800 = vpop.permute.xlu0 %799
      %801 = vrot.lane.b32.xlu0 %v726, 33
      %v802 = vpop.permute.xlu0 %801
      %803 = vrot.lane.b32.xlu0 %v727, 33
      %v804 = vpop.permute.xlu0 %803
      %v805 = vsel %vm356, %v802, %v804
      %v806 = vsel %vm356, %v800, %v802
      %v807 = vsel %vm373, %v806, 0.0
      %v808 = vsel %vm374, %v805, 0.0
      %809 = vst [vmem:[#allocation2 + $0x90] sm:$0xff] %v807
      %810 = vst [vmem:[#allocation2 + $0x98] sm:$0xff] %v808
      %811 = vrot.lane.b32.xlu0 %v725, 32
      %v812 = vpop.permute.xlu0 %811
      %813 = vrot.lane.b32.xlu0 %v726, 32
      %v814 = vpop.permute.xlu0 %813
      %815 = vrot.lane.b32.xlu0 %v727, 32
      %v816 = vpop.permute.xlu0 %815
      %v817 = vsel %vm388, %v814, %v816
      %v818 = vsel %vm388, %v812, %v814
      %819 = vst [vmem:[#allocation2 + $0xa8] sm:$0xff] %v818
      %820 = vst [vmem:[#allocation2 + $0xb0] sm:$0xff] %v817
      %821 = vrot.lane.b32.xlu0 %v725, 31
      %v822 = vpop.permute.xlu0 %821
      %823 = vrot.lane.b32.xlu0 %v726, 31
      %v824 = vpop.permute.xlu0 %823
      %825 = vrot.lane.b32.xlu0 %v727, 31
      %v826 = vpop.permute.xlu0 %825
      %v827 = vsel %vm401, %v824, %v826
      %v828 = vsel %vm401, %v822, %v824
      %v829 = vsel %vm418, %v828, 0.0
      %v830 = vsel %vm419, %v827, 0.0
      %831 = vst [vmem:[#allocation2 + $0xc0] sm:$0xff] %v829
      %832 = vst [vmem:[#allocation2 + $0xc8] sm:$0xff] %v830
      %v833 = vld [vmem:[%s4] sm:$0xff]
      %v834 = vld [vmem:[#allocation2] sm:$0xff]
      %v835 = vld [vmem:[#allocation2 + $0x8] sm:$0xff]
      %v836 = vld [vmem:[#allocation2 + $0x18] sm:$0xff]
      %v837 = vld [vmem:[#allocation2 + $0x20] sm:$0xff]
      %v838 = vld [vmem:[#allocation2 + $0x30] sm:$0xff]
      %v839 = vld [vmem:[#allocation2 + $0x38] sm:$0xff]
      %v840 = vld [vmem:[#allocation2 + $0x48] sm:$0xff]
      %v841 = vld [vmem:[#allocation2 + $0x50] sm:$0xff]
      %v842 = vld [vmem:[#allocation2 + $0x60] sm:$0xff]
      %v843 = vld [vmem:[#allocation2 + $0x68] sm:$0xff]
      %v844 = vld [vmem:[#allocation2 + $0x78] sm:$0xff]
      %v845 = vld [vmem:[#allocation2 + $0x80] sm:$0xff]
      %v846 = vld [vmem:[#allocation2 + $0x90] sm:$0xff]
      %v847 = vld [vmem:[#allocation2 + $0x98] sm:$0xff]
      %v848 = vld [vmem:[#allocation2 + $0xa8] sm:$0xff]
      %v849 = vld [vmem:[#allocation2 + $0xb0] sm:$0xff]
      %v850 = vld [vmem:[#allocation2 + $0xc0] sm:$0xff]
      %v851 = vld [vmem:[#allocation2 + $0xc8] sm:$0xff]
      %852 = vrot.lane.b32.xlu0 %v342, 64
      %v853 = vpop.permute.xlu0 %852
      %854 = vrot.lane.b32.xlu0 %v343, 64
      %v855 = vpop.permute.xlu0 %854
      %856 = vrot.lane.b32.xlu0 %v344, 64
      %v857 = vpop.permute.xlu0 %856
      %v858 = vsel %vm781, %v855, %v857
      %v859 = vsel %vm781, %v853, %v855
      %v860 = vld [vmem:[%s5] sm:$0xff]
      %vm861 = vcmask 64512
      %v863 = vsel %vm861, %v860, 0
      %865 = vmatprep.subr.mxu0 %v858
      %866 = vmatpush1.msra.mxu0 %v859
      %867 = vmatprep.subr.mxu0 0.0
      %868 = vmatpush1.msra.mxu0 0.0
      %869 = vmatprep.subr.mxu0 0.0
      %870 = vmatpush1.msra.mxu0 0.0
      %871 = vmatprep.subr.mxu0 0.0
      %872 = vmatpush1.msra.mxu0 0.0
      %873 = vmatprep.subr.mxu0 0.0
      %874 = vmatpush1.msra.mxu0 0.0
      %875 = vmatprep.subr.mxu0 0.0
      %876 = vmatpush1.msra.mxu0 0.0
      %877 = vmatprep.subr.mxu0 0.0
      %878 = vmatpush1.msra.mxu0 0.0
      %879 = vmatprep.subr.mxu0 0.0
      %880 = vmatpush1.msra.mxu0 0.0
      %881 = vmatprep.subr.mxu0 0.0
      %882 = vmatpush1.msra.mxu0 0.0
      %883 = vmatprep.subr.mxu0 0.0
      %884 = vmatpush1.msra.mxu0 0.0
      %885 = vmatprep.subr.mxu0 0.0
      %886 = vmatpush1.msra.mxu0 0.0
      %887 = vmatprep.subr.mxu0 0.0
      %888 = vmatpush1.msra.mxu0 0.0
      %889 = vmatprep.subr.mxu0 0.0
      %890 = vmatpush1.msra.mxu0 0.0
      %891 = vmatprep.subr.mxu0 0.0
      %892 = vmatpush1.msra.mxu0 0.0
      %893 = vmatprep.subr.mxu0 0.0
      %894 = vmatpush1.msra.mxu0 0.0
      %895 = vmatprep.subr.mxu0 0.0
      %896 = vmatpush1.msra.mxu0 0.0
      %897 = vmatprep.subr.mxu0 0.0
      %898 = vmatpush1.msra.mxu0 0.0
      %899 = vmatprep.subr.mxu0 0.0
      %900 = vmatpush1.msra.mxu0 0.0
      %901 = vmatprep.subr.mxu0 0.0
      %902 = vmatpush1.msra.mxu0 0.0
      %903 = vmatprep.subr.mxu0 0.0
      %904 = vmatpush1.msra.mxu0 0.0
      %905 = vmatprep.subr.mxu0 0.0
      %906 = vmatpush1.msra.mxu0 0.0
      %907 = vmatprep.subr.mxu0 0.0
      %908 = vmatpush1.msra.mxu0 0.0
      %909 = vmatprep.subr.mxu0 0.0
      %910 = vmatpush1.msra.mxu0 0.0
      %911 = vmatprep.subr.mxu0 0.0
      %912 = vmatpush1.msra.mxu0 0.0
      %913 = vmatprep.subr.mxu0 0.0
      %914 = vmatpush1.msra.mxu0 0.0
      %915 = vmatprep.subr.mxu0 0.0
      %916 = vmatpush1.msra.mxu0 0.0
      %917 = vmatprep.subr.mxu0 0.0
      %918 = vmatpush1.msra.mxu0 0.0
      %919 = vmatprep.subr.mxu0 0.0
      %920 = vmatpush1.msra.mxu0 0.0
      %921 = vmatprep.subr.mxu0 0.0
      %922 = vmatpush1.msra.mxu0 0.0
      %923 = vmatprep.subr.mxu0 0.0
      %924 = vmatpush1.msra.mxu0 0.0
      %925 = vmatprep.subr.mxu0 0.0
      %926 = vmatpush1.msra.mxu0 0.0
      %927 = vmatprep.subr.mxu0 0.0
      %928 = vmatpush1.msra.mxu0 0.0
      %929 = vmatprep.mubr.f32.mxu0 0.0
      %930 = vmatmul.mubr.f32.gmra.mrb[0].mxu0 %v863
      %v931 = vpop.f32.mrb[0].mxu0
      %v932 = vadd.f32 0.0, %v931
      %v933 = vpop.f32.mrb[0].mxu0
      %v934 = vadd.f32 0.0, %v933
      %935 = vdwg.mxu0
      %v937 = vsel %vm541, %v833, 0
      %939 = vmatprep.subr.mxu0 %v835
      %940 = vmatpush1.msra.mxu0 %v834
      %941 = vmatprep.subr.mxu0 %v837
      %942 = vmatpush1.msra.mxu0 %v836
      %943 = vmatprep.subr.mxu0 %v839
      %944 = vmatpush1.msra.mxu0 %v838
      %945 = vmatprep.subr.mxu0 %v841
      %946 = vmatpush1.msra.mxu0 %v840
      %947 = vmatprep.subr.mxu0 %v843
      %948 = vmatpush1.msra.mxu0 %v842
      %949 = vmatprep.subr.mxu0 %v845
      %950 = vmatpush1.msra.mxu0 %v844
      %951 = vmatprep.subr.mxu0 %v847
      %952 = vmatpush1.msra.mxu0 %v846
      %953 = vmatprep.subr.mxu0 %v849
      %954 = vmatpush1.msra.mxu0 %v848
      %955 = vmatprep.subr.mxu0 %v851
      %956 = vmatpush1.msra.mxu0 %v850
      %957 = vmatprep.subr.mxu0 0.0
      %958 = vmatpush1.msra.mxu0 0.0
      %959 = vmatprep.subr.mxu0 0.0
      %960 = vmatpush1.msra.mxu0 0.0
      %961 = vmatprep.subr.mxu0 0.0
      %962 = vmatpush1.msra.mxu0 0.0
      %963 = vmatprep.subr.mxu0 0.0
      %964 = vmatpush1.msra.mxu0 0.0
      %965 = vmatprep.subr.mxu0 0.0
      %966 = vmatpush1.msra.mxu0 0.0
      %967 = vmatprep.subr.mxu0 0.0
      %968 = vmatpush1.msra.mxu0 0.0
      %969 = vmatprep.subr.mxu0 0.0
      %970 = vmatpush1.msra.mxu0 0.0
      %971 = vmatprep.subr.mxu0 0.0
      %972 = vmatpush1.msra.mxu0 0.0
      %973 = vmatprep.subr.mxu0 0.0
      %974 = vmatpush1.msra.mxu0 0.0
      %975 = vmatprep.subr.mxu0 0.0
      %976 = vmatpush1.msra.mxu0 0.0
      %977 = vmatprep.subr.mxu0 0.0
      %978 = vmatpush1.msra.mxu0 0.0
      %979 = vmatprep.subr.mxu0 0.0
      %980 = vmatpush1.msra.mxu0 0.0
      %981 = vmatprep.subr.mxu0 0.0
      %982 = vmatpush1.msra.mxu0 0.0
      %983 = vmatprep.subr.mxu0 0.0
      %984 = vmatpush1.msra.mxu0 0.0
      %985 = vmatprep.subr.mxu0 0.0
      %986 = vmatpush1.msra.mxu0 0.0
      %987 = vmatprep.subr.mxu0 0.0
      %988 = vmatpush1.msra.mxu0 0.0
      %989 = vmatprep.subr.mxu0 0.0
      %990 = vmatpush1.msra.mxu0 0.0
      %991 = vmatprep.subr.mxu0 0.0
      %992 = vmatpush1.msra.mxu0 0.0
      %993 = vmatprep.subr.mxu0 0.0
      %994 = vmatpush1.msra.mxu0 0.0
      %995 = vmatprep.subr.mxu0 0.0
      %996 = vmatpush1.msra.mxu0 0.0
      %997 = vmatprep.subr.mxu0 0.0
      %998 = vmatpush1.msra.mxu0 0.0
      %999 = vmatprep.subr.mxu0 0.0
      %1000 = vmatpush1.msra.mxu0 0.0
      %1001 = vmatprep.subr.mxu0 0.0
      %1002 = vmatpush1.msra.mxu0 0.0
      %1003 = vmatprep.mubr.f32.mxu0 0.0
      %1004 = vmatmul.mubr.f32.gmra.mrb[0].mxu0 %v937
      %v1005 = vpop.f32.mrb[0].mxu0
      %v1006 = vadd.f32 %v932, %v1005
      %v1007 = vpop.f32.mrb[0].mxu0
      %v1008 = vadd.f32 %v934, %v1007
      %1009 = vdwg.mxu0
      %v1010 = vld [vmem:[%s7] sm:$0xff]
      %1012 = vset.pattern.permute.xlu0 0
      %1013 = vperm.xlu0 %1012, %v1010
      %v1014 = vpop.permute.xlu0 %1013
      %v1016 = vadd.f32 %v1006, %v1014
      %v1017 = vadd.f32 %v1008, %v1014
      %v1018 = vmul.f32 %v1016, 0.5
      %v1019 = vmul.f32 %v1017, 0.5
      %v1020 = vmul.f32 %v1016, 0.70710677
      %v1021 = vmul.f32 %v1017, 0.70710677
      %v1022 = verf.f32.pop %v1020
      %v1023 = verf.f32.pop %v1021
      %v1024 = vadd.f32 %v1022, 1.0
      %v1025 = vadd.f32 %v1023, 1.0
      %v1026 = vmul.f32 %v1018, %v1024
      %v1027 = vmul.f32 %v1019, %v1025
      %1028 = vst [vmem:[%s341] sm:$0xff] %v1026
      %1029 = vst [vmem:[%s341 + $0x8] sm:$0xff] %v1027
      %p1030 = scmp.lt.s32.totalorder %s23, 1
      %s1031 = scalar_select %p1030, %s23, 1
      %p1032 = scmp.lt.s32.totalorder %s24, 3
      %s1033 = scalar_select %p1032, %s24, 3
      %s1034 = smul.addr %s1033, 2
      %s1035 = smul.addr %s1031, 8
      %s1036 = sadd.s32 %s1034, %s1035
      %s1037 = smul.addr %s1036, 8
      %s1038 = scalar_lea.vmem %s8, %s1037
      // Predicated region
      $region53: #{conv_up_block_forward.1} parent=51 // pred_check
        %p1039 = pneg %p226
      $region54: #{conv_up_block_forward.1} parent=51 // pred_check_branch
        %1041 = sbr.rel (%p1039) target = $region56
      $region55: #{conv_up_block_forward.1} parent=51 // pred_region
        _
      $region56: #{conv_up_block_forward.1} parent=51 // pred_fallthru
        _
    $region52: #{conv_up_block_forward.1} parent=5 // pred_fallthru
      _
    %p1042 = scmp.le.s32.totalorder 2, %s14
    // Predicated region
    $region57: #{conv_up_block_forward.1} parent=5 // pred_check
      %p1043 = pneg %p1042
    $region58: #{conv_up_block_forward.1} parent=5 // pred_check_branch
      %1045 = sbr.rel (%p1043) target = $region60
    $region59: #{conv_up_block_forward.1} parent=5 // pred_region
      %s1046 = ssub.s32 %s14, 2
      // Predicated region
      $region61: #{conv_up_block_forward.1} parent=59 // pred_check
        %p1047 = pneg %p232
      $region62: #{conv_up_block_forward.1} parent=59 // pred_check_branch
        %1049 = sbr.rel (%p1047) target = $region64
      $region63: #{conv_up_block_forward.1} parent=59 // pred_region
        %p1050 = scmp.lt.s32.totalorder %s25, 1
        %s1051 = scalar_select %p1050, %s25, 1
        %p1052 = scmp.lt.s32.totalorder %s26, 3
        %s1053 = scalar_select %p1052, %s26, 3
        %s1054 = smul.addr %s1053, 2
        %s1055 = smul.addr %s1051, 8
        %s1056 = sadd.s32 %s1054, %s1055
        %s1057 = smul.addr %s1056, 8
        %s1058 = scalar_lea.vmem %s8, %s1057
      $region64: #{conv_up_block_forward.1} parent=59 // pred_fallthru
        _
    $region60: #{conv_up_block_forward.1} parent=5 // pred_fallthru
      _
  $region6: #{conv_up_block_forward.1} parent=0 // loop_footer
    %s18 = sadd.s32 1, %s14
  $region7: #{conv_up_block_forward.1} parent=0 // loop_footer_branch
    %13 = sbr.rel target = $region3
  $region8: #{conv_up_block_forward.1} parent=0 // loop_exit
    _

</llo_original>
